<compile_context>
chip_gen: v7x
topology: tpu7x:2x2x1
jax: 0.10.0
libtpu: 0.0.40
codegen_flags: <defaults>
</compile_context>

<pallas_src>
import functools

import jax
import jax.numpy as jnp
from jax import lax
from jax.experimental import pallas as pl
from jax.experimental.pallas import tpu as pltpu

ALPHA = 0.2          # lr_slope
BN_EPS = 1e-5

N, H, W, C_IN = 2, 16, 16, 2
LAYERS = [(2, 8), (8, 16), (16, 32), (32, 64)]   # (Cin, Cout) per 3x3 layer
CIN_PAD = [8, 8, 16, 32]       # layer-1 input channels zero-padded 2 -> 8
P_IMG = H * W                  # 256 flat pixels per image (lane dim)
MAX_SHIFT = 2 * W + 2          # 34 = largest flat-pixel shift of a 3x3 tap
COLS = P_IMG + 128             # 384 canvas columns (>= 256 + 34, lane-tile mult)
TAP_OFFS = tuple((k // 3) * W + (k % 3) for k in range(9))
K_MAX = 9 * 32                 # 288 patch rows for the widest layer


def _latent4lsnd_kernel(x_ref, w1_ref, w2_ref, w3_ref, w4_ref,
                        b1_ref, b2_ref, b3_ref, o_ref,
                        s0, s1, s2, s3, patch, *, alpha):
    # x_ref : (C_IN, 256)      one image, channel-major
    # wl_ref: (Cout, 9*CinP)   tap-fused, BN-scale-folded weights
    # bl_ref: (Cout, 1)        folded BN shifts for layers 1..3
    # o_ref : (64, 256)        conv4 canvas for this image (lane-dense store)
    # s0..s3: (CinP, 384)      channel-major activation canvases (VMEM only)
    # patch : (288, 256)       im2col scratch shared by all four layers

    def lrelu(y):
        return jnp.where(y >= 0.0, y, alpha * y)

    def conv3x3(src, w_ref, cin):
        # Build the (9*cin, 256) im2col patch: 9 lane-shifted copies of the
        # source canvas stacked at 8-aligned sublane offsets, then ONE MXU
        # matmul (Cout, 9*cin) @ (9*cin, 256).
        for k, off in enumerate(TAP_OFFS):
            patch[k * cin:(k + 1) * cin, :] = src[:, off:off + P_IMG]
        return jnp.dot(w_ref[...], patch[0:9 * cin, :],
                       preferred_element_type=jnp.float32)

    # Input canvas: zero (covers the zero-padded channels 2..7 and the pad
    # columns), then drop the real image into the top-left corner.
    s0[...] = jnp.zeros_like(s0)
    s0[0:C_IN, 0:P_IMG] = x_ref[...]
    # Intermediate canvases: only the read-only pad columns need zeroing; the
    # live columns [0, 256) are fully overwritten below before being read.
    s1[:, P_IMG:COLS] = jnp.zeros((8, COLS - P_IMG), jnp.float32)
    s2[:, P_IMG:COLS] = jnp.zeros((16, COLS - P_IMG), jnp.float32)
    s3[:, P_IMG:COLS] = jnp.zeros((32, COLS - P_IMG), jnp.float32)

    # conv1..conv3: conv + folded-BN shift + LeakyReLU; results stay in VMEM.
    s1[:, 0:P_IMG] = lrelu(conv3x3(s0, w1_ref, 8) + b1_ref[...])
    s2[:, 0:P_IMG] = lrelu(conv3x3(s1, w2_ref, 8) + b2_ref[...])
    s3[:, 0:P_IMG] = lrelu(conv3x3(s2, w3_ref, 16) + b3_ref[...])
    # conv4: plain conv (no BN) + LeakyReLU, written straight to the output.
    o_ref[...] = lrelu(conv3x3(s3, w4_ref, 32))


def pack_params(params):
    """Fold BN scale into the conv weights, fuse the 9 taps into one 2-D
    (Cout, 9*CinP) matrix per layer, and pack BN shifts as (Cout, 1).  Done
    once at init."""
    packed_w, packed_b = [], []
    for l, (w, scale, shift) in enumerate(params):
        kh, kw, cin, cout = w.shape
        cin_p = CIN_PAD[l]
        wf = w * scale[None, None, None, :]                   # (3,3,cin,cout)
        if cin_p != cin:                                      # layer-1: 2 -> 8
            wf = jnp.pad(wf, ((0, 0), (0, 0), (0, cin_p - cin), (0, 0)))
        # (3,3,cinP,cout) -> (cout, 3,3,cinP) -> (cout, 9*cinP); column
        # k*cinP + c multiplies patch row k*cinP + c (tap k = i*3 + j).
        packed_w.append(jnp.transpose(wf, (3, 0, 1, 2)).reshape(cout, 9 * cin_p))
        if l < 3:                                             # conv4 has no BN
            packed_b.append(shift.reshape(cout, 1))
    return tuple(packed_w), tuple(packed_b)


@jax.jit
def latent4lsnd_forward(x, packed_w, packed_b):
    """x: (N, 16, 16, 2) NHWC float32 -> (N, 8, 8, 64) float32."""
    w1, w2, w3, w4 = packed_w
    b1, b2, b3 = packed_b
    # Channel-major flat canvases: (N, C, 256) with flat pixel p = oh*16 + ow.
    xc = jnp.transpose(x.reshape(N, P_IMG, C_IN), (0, 2, 1))

    kernel = functools.partial(_latent4lsnd_kernel, alpha=ALPHA)
    out = pl.pallas_call(
        kernel,
        out_shape=jax.ShapeDtypeStruct((N, 64, P_IMG), jnp.float32),
        grid=(N,),                      # one image per program (2 TCs on v7x)
        in_specs=[
            pl.BlockSpec((None, C_IN, P_IMG), lambda n: (n, 0, 0)),
            pl.BlockSpec((8, 72), lambda n: (0, 0)),
            pl.BlockSpec((16, 72), lambda n: (0, 0)),
            pl.BlockSpec((32, 144), lambda n: (0, 0)),
            pl.BlockSpec((64, 288), lambda n: (0, 0)),
            pl.BlockSpec((8, 1), lambda n: (0, 0)),
            pl.BlockSpec((16, 1), lambda n: (0, 0)),
            pl.BlockSpec((32, 1), lambda n: (0, 0)),
        ],
        out_specs=pl.BlockSpec((None, 64, P_IMG), lambda n: (n, 0, 0)),
        scratch_shapes=[
            pltpu.VMEM((8, COLS), jnp.float32),       # s0 (input, Cin padded)
            pltpu.VMEM((8, COLS), jnp.float32),       # s1
            pltpu.VMEM((16, COLS), jnp.float32),      # s2
            pltpu.VMEM((32, COLS), jnp.float32),      # s3
            pltpu.VMEM((K_MAX, P_IMG), jnp.float32),  # shared im2col patch
        ],
        compiler_params=pltpu.CompilerParams(
            dimension_semantics=("parallel",)),
    )(xc, w1, w2, w3, w4, b1, b2, b3)

    # Valid window after four 3x3 valid convs: 16 -> 14 -> 12 -> 10 -> 8.
    out = out.reshape(N, 64, H, W)[:, :, :8, :8]
    return jnp.transpose(out, (0, 2, 3, 1))


def init_params(key):
    """Deterministic synthetic parameters matching Latent4LSND's shapes."""
    params = []
    for idx, (cin, cout) in enumerate(LAYERS):
        key, kw, kg, kb, km, kv = jax.random.split(key, 6)
        fan_in = cin * 9
        w = jax.random.normal(kw, (3, 3, cin, cout), jnp.float32) / jnp.sqrt(fan_in)
        if idx < 3:
            # ConvBatchLeaky: fold BatchNorm2d (eval mode) into scale/shift.
            gamma = 1.0 + 0.1 * jax.random.normal(kg, (cout,), jnp.float32)
            beta = 0.1 * jax.random.normal(kb, (cout,), jnp.float32)
            rmean = 0.05 * jax.random.normal(km, (cout,), jnp.float32)
            rvar = 1.0 + 0.1 * jax.random.uniform(kv, (cout,), jnp.float32)
            scale = gamma / jnp.sqrt(rvar + BN_EPS)
            shift = beta - rmean * scale
        else:
            # conv4: plain Conv2d (no BN), but F.leaky_relu is still applied.
            scale = jnp.ones((cout,), jnp.float32)
            shift = jnp.zeros((cout,), jnp.float32)
        params.append((w, scale, shift))
    return params


def reference_forward(x, params):
    """Pure-JAX reference (XLA conv at HIGHEST precision) for correctness."""
    for (w, scale, shift) in params:
        y = lax.conv_general_dilated(
            x, w, window_strides=(1, 1), padding="VALID",
            dimension_numbers=("NHWC", "HWIO", "NHWC"),
            precision=lax.Precision.HIGHEST)
        y = y * scale + shift
        x = jnp.where(y >= 0.0, y, ALPHA * y)
    return x


if __name__ == "__main__":
    key = jax.random.PRNGKey(0)
    key, kx = jax.random.split(key)
    # NHWC input; corresponds to PyTorch NCHW (2, 2, 16, 16).
    x = jax.random.normal(kx, (N, H, W, C_IN), jnp.float32)
    params = init_params(key)
    packed_w, packed_b = pack_params(params)

    out = jax.block_until_ready(latent4lsnd_forward(x, packed_w, packed_b))
    ref = jax.block_until_ready(reference_forward(x, params))

    assert out.shape == (N, 8, 8, 64), out.shape
    max_err = float(jnp.max(jnp.abs(out - ref)))
    assert jnp.allclose(out, ref, atol=1e-4, rtol=1e-4), max_err
    print("KERNEL_OK")
</pallas_src>

<mosaic_0001>
module attributes {stable_mosaic.version = 11 : i64} {
  func.func @_latent4lsnd_kernel(%arg0: i32, %arg1: memref<1x2x256xf32, #tpu.memory_space<vmem>>, %arg2: memref<8x72xf32, #tpu.memory_space<vmem>>, %arg3: memref<16x72xf32, #tpu.memory_space<vmem>>, %arg4: memref<32x144xf32, #tpu.memory_space<vmem>>, %arg5: memref<64x288xf32, #tpu.memory_space<vmem>>, %arg6: memref<8x1xf32, #tpu.memory_space<vmem>>, %arg7: memref<16x1xf32, #tpu.memory_space<vmem>>, %arg8: memref<32x1xf32, #tpu.memory_space<vmem>>, %arg9: memref<1x64x256xf32, #tpu.memory_space<vmem>>, %arg10: memref<8x384xf32, #tpu.memory_space<vmem>>, %arg11: memref<8x384xf32, #tpu.memory_space<vmem>>, %arg12: memref<16x384xf32, #tpu.memory_space<vmem>>, %arg13: memref<32x384xf32, #tpu.memory_space<vmem>>, %arg14: memref<288x256xf32, #tpu.memory_space<vmem>>) attributes {dimension_semantics = [#tpu.dimension_semantics<parallel>], iteration_bounds = array<i64: 2>, scalar_prefetch = 0 : i64, scratch_operands = 5 : i64, tpu.core_type = #tpu.core_type<tc>, window_params = [{transform_indices = @transform_0, window_bounds = array<i64: 1, 2, 256>}, {pipeline_mode = #tpu.pipeline_mode<synchronous>, transform_indices = @transform_1, window_bounds = array<i64: 8, 72>}, {pipeline_mode = #tpu.pipeline_mode<synchronous>, transform_indices = @transform_2, window_bounds = array<i64: 16, 72>}, {pipeline_mode = #tpu.pipeline_mode<synchronous>, transform_indices = @transform_3, window_bounds = array<i64: 32, 144>}, {pipeline_mode = #tpu.pipeline_mode<synchronous>, transform_indices = @transform_4, window_bounds = array<i64: 64, 288>}, {pipeline_mode = #tpu.pipeline_mode<synchronous>, transform_indices = @transform_5, window_bounds = array<i64: 8, 1>}, {pipeline_mode = #tpu.pipeline_mode<synchronous>, transform_indices = @transform_6, window_bounds = array<i64: 16, 1>}, {pipeline_mode = #tpu.pipeline_mode<synchronous>, transform_indices = @transform_7, window_bounds = array<i64: 32, 1>}, {transform_indices = @transform_8, window_bounds = array<i64: 1, 64, 256>}]} {
    %cst = arith.constant 0.000000e+00 : f32
    %0 = vector.broadcast %cst : f32 to vector<8x384xf32>
    %c0 = arith.constant 0 : index
    %c0_0 = arith.constant 0 : index
    %1 = vector.load %arg10[%c0, %c0_0] : memref<8x384xf32, #tpu.memory_space<vmem>>, vector<8x384xf32>
    tpu.vector_store %arg10[%c0, %c0_0], %0 {strides = array<i32>} : memref<8x384xf32, #tpu.memory_space<vmem>>, vector<8x384xf32>,
    %c0_1 = arith.constant 0 : index
    %c0_2 = arith.constant 0 : index
    %c0_3 = arith.constant 0 : index
    %2 = vector.load %arg1[%c0_1, %c0_2, %c0_3] : memref<1x2x256xf32, #tpu.memory_space<vmem>>, vector<1x2x256xf32>
    %3 = vector.shape_cast %2 : vector<1x2x256xf32> to vector<2x256xf32>
    %c0_4 = arith.constant 0 : index
    %c0_5 = arith.constant 0 : index
    %4 = vector.load %arg10[%c0_4, %c0_5] : memref<8x384xf32, #tpu.memory_space<vmem>>, vector<2x256xf32>
    tpu.vector_store %arg10[%c0_4, %c0_5], %3 {strides = array<i32>} : memref<8x384xf32, #tpu.memory_space<vmem>>, vector<2x256xf32>,
    %cst_6 = arith.constant 0.000000e+00 : f32
    %5 = vector.broadcast %cst_6 : f32 to vector<8x128xf32>
    %c0_7 = arith.constant 0 : index
    %c256 = arith.constant 256 : index
    %6 = vector.load %arg11[%c0_7, %c256] : memref<8x384xf32, #tpu.memory_space<vmem>>, vector<8x128xf32>
    tpu.vector_store %arg11[%c0_7, %c256], %5 {strides = array<i32>} : memref<8x384xf32, #tpu.memory_space<vmem>>, vector<8x128xf32>,
    %cst_8 = arith.constant 0.000000e+00 : f32
    %7 = vector.broadcast %cst_8 : f32 to vector<16x128xf32>
    %c0_9 = arith.constant 0 : index
    %c256_10 = arith.constant 256 : index
    %8 = vector.load %arg12[%c0_9, %c256_10] : memref<16x384xf32, #tpu.memory_space<vmem>>, vector<16x128xf32>
    tpu.vector_store %arg12[%c0_9, %c256_10], %7 {strides = array<i32>} : memref<16x384xf32, #tpu.memory_space<vmem>>, vector<16x128xf32>,
    %cst_11 = arith.constant 0.000000e+00 : f32
    %9 = vector.broadcast %cst_11 : f32 to vector<32x128xf32>
    %c0_12 = arith.constant 0 : index
    %c256_13 = arith.constant 256 : index
    %10 = vector.load %arg13[%c0_12, %c256_13] : memref<32x384xf32, #tpu.memory_space<vmem>>, vector<32x128xf32>
    tpu.vector_store %arg13[%c0_12, %c256_13], %9 {strides = array<i32>} : memref<32x384xf32, #tpu.memory_space<vmem>>, vector<32x128xf32>,
    %c0_14 = arith.constant 0 : index
    %c0_15 = arith.constant 0 : index
    %11 = vector.load %arg10[%c0_14, %c0_15] : memref<8x384xf32, #tpu.memory_space<vmem>>, vector<8x256xf32>
    %c0_16 = arith.constant 0 : index
    %c0_17 = arith.constant 0 : index
    %12 = vector.load %arg14[%c0_16, %c0_17] : memref<288x256xf32, #tpu.memory_space<vmem>>, vector<8x256xf32>
    tpu.vector_store %arg14[%c0_16, %c0_17], %11 {strides = array<i32>} : memref<288x256xf32, #tpu.memory_space<vmem>>, vector<8x256xf32>,
    %c0_18 = arith.constant 0 : index
    %c1 = arith.constant 1 : index
    %13 = vector.load %arg10[%c0_18, %c1] : memref<8x384xf32, #tpu.memory_space<vmem>>, vector<8x256xf32>
    %c8 = arith.constant 8 : index
    %c0_19 = arith.constant 0 : index
    %14 = vector.load %arg14[%c8, %c0_19] : memref<288x256xf32, #tpu.memory_space<vmem>>, vector<8x256xf32>
    tpu.vector_store %arg14[%c8, %c0_19], %13 {strides = array<i32>} : memref<288x256xf32, #tpu.memory_space<vmem>>, vector<8x256xf32>,
    %c0_20 = arith.constant 0 : index
    %c2 = arith.constant 2 : index
    %15 = vector.load %arg10[%c0_20, %c2] : memref<8x384xf32, #tpu.memory_space<vmem>>, vector<8x256xf32>
    %c16 = arith.constant 16 : index
    %c0_21 = arith.constant 0 : index
    %16 = vector.load %arg14[%c16, %c0_21] : memref<288x256xf32, #tpu.memory_space<vmem>>, vector<8x256xf32>
    tpu.vector_store %arg14[%c16, %c0_21], %15 {strides = array<i32>} : memref<288x256xf32, #tpu.memory_space<vmem>>, vector<8x256xf32>,
    %c0_22 = arith.constant 0 : index
    %c16_23 = arith.constant 16 : index
    %17 = vector.load %arg10[%c0_22, %c16_23] : memref<8x384xf32, #tpu.memory_space<vmem>>, vector<8x256xf32>
    %c24 = arith.constant 24 : index
    %c0_24 = arith.constant 0 : index
    %18 = vector.load %arg14[%c24, %c0_24] : memref<288x256xf32, #tpu.memory_space<vmem>>, vector<8x256xf32>
    tpu.vector_store %arg14[%c24, %c0_24], %17 {strides = array<i32>} : memref<288x256xf32, #tpu.memory_space<vmem>>, vector<8x256xf32>,
    %c0_25 = arith.constant 0 : index
    %c17 = arith.constant 17 : index
    %19 = vector.load %arg10[%c0_25, %c17] : memref<8x384xf32, #tpu.memory_space<vmem>>, vector<8x256xf32>
    %c32 = arith.constant 32 : index
    %c0_26 = arith.constant 0 : index
    %20 = vector.load %arg14[%c32, %c0_26] : memref<288x256xf32, #tpu.memory_space<vmem>>, vector<8x256xf32>
    tpu.vector_store %arg14[%c32, %c0_26], %19 {strides = array<i32>} : memref<288x256xf32, #tpu.memory_space<vmem>>, vector<8x256xf32>,
    %c0_27 = arith.constant 0 : index
    %c18 = arith.constant 18 : index
    %21 = vector.load %arg10[%c0_27, %c18] : memref<8x384xf32, #tpu.memory_space<vmem>>, vector<8x256xf32>
    %c40 = arith.constant 40 : index
    %c0_28 = arith.constant 0 : index
    %22 = vector.load %arg14[%c40, %c0_28] : memref<288x256xf32, #tpu.memory_space<vmem>>, vector<8x256xf32>
    tpu.vector_store %arg14[%c40, %c0_28], %21 {strides = array<i32>} : memref<288x256xf32, #tpu.memory_space<vmem>>, vector<8x256xf32>,
    %c0_29 = arith.constant 0 : index
    %c32_30 = arith.constant 32 : index
    %23 = vector.load %arg10[%c0_29, %c32_30] : memref<8x384xf32, #tpu.memory_space<vmem>>, vector<8x256xf32>
    %c48 = arith.constant 48 : index
    %c0_31 = arith.constant 0 : index
    %24 = vector.load %arg14[%c48, %c0_31] : memref<288x256xf32, #tpu.memory_space<vmem>>, vector<8x256xf32>
    tpu.vector_store %arg14[%c48, %c0_31], %23 {strides = array<i32>} : memref<288x256xf32, #tpu.memory_space<vmem>>, vector<8x256xf32>,
    %c0_32 = arith.constant 0 : index
    %c33 = arith.constant 33 : index
    %25 = vector.load %arg10[%c0_32, %c33] : memref<8x384xf32, #tpu.memory_space<vmem>>, vector<8x256xf32>
    %c56 = arith.constant 56 : index
    %c0_33 = arith.constant 0 : index
    %26 = vector.load %arg14[%c56, %c0_33] : memref<288x256xf32, #tpu.memory_space<vmem>>, vector<8x256xf32>
    tpu.vector_store %arg14[%c56, %c0_33], %25 {strides = array<i32>} : memref<288x256xf32, #tpu.memory_space<vmem>>, vector<8x256xf32>,
    %c0_34 = arith.constant 0 : index
    %c34 = arith.constant 34 : index
    %27 = vector.load %arg10[%c0_34, %c34] : memref<8x384xf32, #tpu.memory_space<vmem>>, vector<8x256xf32>
    %c64 = arith.constant 64 : index
    %c0_35 = arith.constant 0 : index
    %28 = vector.load %arg14[%c64, %c0_35] : memref<288x256xf32, #tpu.memory_space<vmem>>, vector<8x256xf32>
    tpu.vector_store %arg14[%c64, %c0_35], %27 {strides = array<i32>} : memref<288x256xf32, #tpu.memory_space<vmem>>, vector<8x256xf32>,
    %c0_36 = arith.constant 0 : index
    %c0_37 = arith.constant 0 : index
    %29 = vector.load %arg2[%c0_36, %c0_37] : memref<8x72xf32, #tpu.memory_space<vmem>>, vector<8x72xf32>
    %c0_38 = arith.constant 0 : index
    %c0_39 = arith.constant 0 : index
    %30 = vector.load %arg14[%c0_38, %c0_39] : memref<288x256xf32, #tpu.memory_space<vmem>>, vector<72x256xf32>
    %cst_40 = arith.constant dense<0.000000e+00> : vector<8x256xf32>
    %31 = tpu.matmul %29, %30, %cst_40 {dimension_numbers = #tpu.dot_dimension_numbers<[1], [0], [0], [1], [0, 0, 1, 1], [], []>} : vector<8x72xf32>, vector<72x256xf32>, vector<8x256xf32> -> vector<8x256xf32>
    %c0_41 = arith.constant 0 : index
    %c0_42 = arith.constant 0 : index
    %32 = vector.load %arg6[%c0_41, %c0_42] : memref<8x1xf32, #tpu.memory_space<vmem>>, vector<8x1xf32>
    %33 = vector.broadcast %32 : vector<8x1xf32> to vector<8x256xf32>
    %34 = arith.addf %31, %33 : vector<8x256xf32>
    %cst_43 = arith.constant 0.000000e+00 : f32
    %35 = vector.broadcast %cst_43 : f32 to vector<8x256xf32>
    %36 = arith.cmpf oge, %34, %35 : vector<8x256xf32>
    %cst_44 = arith.constant 2.000000e-01 : f32
    %37 = vector.broadcast %cst_44 : f32 to vector<8x256xf32>
    %38 = arith.mulf %37, %34 : vector<8x256xf32>
    %39 = arith.select %36, %34, %38 : vector<8x256xi1>, vector<8x256xf32>
    %c0_45 = arith.constant 0 : index
    %c0_46 = arith.constant 0 : index
    %40 = vector.load %arg11[%c0_45, %c0_46] : memref<8x384xf32, #tpu.memory_space<vmem>>, vector<8x256xf32>
    tpu.vector_store %arg11[%c0_45, %c0_46], %39 {strides = array<i32>} : memref<8x384xf32, #tpu.memory_space<vmem>>, vector<8x256xf32>,
    %c0_47 = arith.constant 0 : index
    %c0_48 = arith.constant 0 : index
    %41 = vector.load %arg11[%c0_47, %c0_48] : memref<8x384xf32, #tpu.memory_space<vmem>>, vector<8x256xf32>
    %c0_49 = arith.constant 0 : index
    %c0_50 = arith.constant 0 : index
    %42 = vector.load %arg14[%c0_49, %c0_50] : memref<288x256xf32, #tpu.memory_space<vmem>>, vector<8x256xf32>
    tpu.vector_store %arg14[%c0_49, %c0_50], %41 {strides = array<i32>} : memref<288x256xf32, #tpu.memory_space<vmem>>, vector<8x256xf32>,
    %c0_51 = arith.constant 0 : index
    %c1_52 = arith.constant 1 : index
    %43 = vector.load %arg11[%c0_51, %c1_52] : memref<8x384xf32, #tpu.memory_space<vmem>>, vector<8x256xf32>
    %c8_53 = arith.constant 8 : index
    %c0_54 = arith.constant 0 : index
    %44 = vector.load %arg14[%c8_53, %c0_54] : memref<288x256xf32, #tpu.memory_space<vmem>>, vector<8x256xf32>
    tpu.vector_store %arg14[%c8_53, %c0_54], %43 {strides = array<i32>} : memref<288x256xf32, #tpu.memory_space<vmem>>, vector<8x256xf32>,
    %c0_55 = arith.constant 0 : index
    %c2_56 = arith.constant 2 : index
    %45 = vector.load %arg11[%c0_55, %c2_56] : memref<8x384xf32, #tpu.memory_space<vmem>>, vector<8x256xf32>
    %c16_57 = arith.constant 16 : index
    %c0_58 = arith.constant 0 : index
    %46 = vector.load %arg14[%c16_57, %c0_58] : memref<288x256xf32, #tpu.memory_space<vmem>>, vector<8x256xf32>
    tpu.vector_store %arg14[%c16_57, %c0_58], %45 {strides = array<i32>} : memref<288x256xf32, #tpu.memory_space<vmem>>, vector<8x256xf32>,
    %c0_59 = arith.constant 0 : index
    %c16_60 = arith.constant 16 : index
    %47 = vector.load %arg11[%c0_59, %c16_60] : memref<8x384xf32, #tpu.memory_space<vmem>>, vector<8x256xf32>
    %c24_61 = arith.constant 24 : index
    %c0_62 = arith.constant 0 : index
    %48 = vector.load %arg14[%c24_61, %c0_62] : memref<288x256xf32, #tpu.memory_space<vmem>>, vector<8x256xf32>
    tpu.vector_store %arg14[%c24_61, %c0_62], %47 {strides = array<i32>} : memref<288x256xf32, #tpu.memory_space<vmem>>, vector<8x256xf32>,
    %c0_63 = arith.constant 0 : index
    %c17_64 = arith.constant 17 : index
    %49 = vector.load %arg11[%c0_63, %c17_64] : memref<8x384xf32, #tpu.memory_space<vmem>>, vector<8x256xf32>
    %c32_65 = arith.constant 32 : index
    %c0_66 = arith.constant 0 : index
    %50 = vector.load %arg14[%c32_65, %c0_66] : memref<288x256xf32, #tpu.memory_space<vmem>>, vector<8x256xf32>
    tpu.vector_store %arg14[%c32_65, %c0_66], %49 {strides = array<i32>} : memref<288x256xf32, #tpu.memory_space<vmem>>, vector<8x256xf32>,
    %c0_67 = arith.constant 0 : index
    %c18_68 = arith.constant 18 : index
    %51 = vector.load %arg11[%c0_67, %c18_68] : memref<8x384xf32, #tpu.memory_space<vmem>>, vector<8x256xf32>
    %c40_69 = arith.constant 40 : index
    %c0_70 = arith.constant 0 : index
    %52 = vector.load %arg14[%c40_69, %c0_70] : memref<288x256xf32, #tpu.memory_space<vmem>>, vector<8x256xf32>
    tpu.vector_store %arg14[%c40_69, %c0_70], %51 {strides = array<i32>} : memref<288x256xf32, #tpu.memory_space<vmem>>, vector<8x256xf32>,
    %c0_71 = arith.constant 0 : index
    %c32_72 = arith.constant 32 : index
    %53 = vector.load %arg11[%c0_71, %c32_72] : memref<8x384xf32, #tpu.memory_space<vmem>>, vector<8x256xf32>
    %c48_73 = arith.constant 48 : index
    %c0_74 = arith.constant 0 : index
    %54 = vector.load %arg14[%c48_73, %c0_74] : memref<288x256xf32, #tpu.memory_space<vmem>>, vector<8x256xf32>
    tpu.vector_store %arg14[%c48_73, %c0_74], %53 {strides = array<i32>} : memref<288x256xf32, #tpu.memory_space<vmem>>, vector<8x256xf32>,
    %c0_75 = arith.constant 0 : index
    %c33_76 = arith.constant 33 : index
    %55 = vector.load %arg11[%c0_75, %c33_76] : memref<8x384xf32, #tpu.memory_space<vmem>>, vector<8x256xf32>
    %c56_77 = arith.constant 56 : index
    %c0_78 = arith.constant 0 : index
    %56 = vector.load %arg14[%c56_77, %c0_78] : memref<288x256xf32, #tpu.memory_space<vmem>>, vector<8x256xf32>
    tpu.vector_store %arg14[%c56_77, %c0_78], %55 {strides = array<i32>} : memref<288x256xf32, #tpu.memory_space<vmem>>, vector<8x256xf32>,
    %c0_79 = arith.constant 0 : index
    %c34_80 = arith.constant 34 : index
    %57 = vector.load %arg11[%c0_79, %c34_80] : memref<8x384xf32, #tpu.memory_space<vmem>>, vector<8x256xf32>
    %c64_81 = arith.constant 64 : index
    %c0_82 = arith.constant 0 : index
    %58 = vector.load %arg14[%c64_81, %c0_82] : memref<288x256xf32, #tpu.memory_space<vmem>>, vector<8x256xf32>
    tpu.vector_store %arg14[%c64_81, %c0_82], %57 {strides = array<i32>} : memref<288x256xf32, #tpu.memory_space<vmem>>, vector<8x256xf32>,
    %c0_83 = arith.constant 0 : index
    %c0_84 = arith.constant 0 : index
    %59 = vector.load %arg3[%c0_83, %c0_84] : memref<16x72xf32, #tpu.memory_space<vmem>>, vector<16x72xf32>
    %c0_85 = arith.constant 0 : index
    %c0_86 = arith.constant 0 : index
    %60 = vector.load %arg14[%c0_85, %c0_86] : memref<288x256xf32, #tpu.memory_space<vmem>>, vector<72x256xf32>
    %cst_87 = arith.constant dense<0.000000e+00> : vector<16x256xf32>
    %61 = tpu.matmul %59, %60, %cst_87 {dimension_numbers = #tpu.dot_dimension_numbers<[1], [0], [0], [1], [0, 0, 1, 1], [], []>} : vector<16x72xf32>, vector<72x256xf32>, vector<16x256xf32> -> vector<16x256xf32>
    %c0_88 = arith.constant 0 : index
    %c0_89 = arith.constant 0 : index
    %62 = vector.load %arg7[%c0_88, %c0_89] : memref<16x1xf32, #tpu.memory_space<vmem>>, vector<16x1xf32>
    %63 = vector.broadcast %62 : vector<16x1xf32> to vector<16x256xf32>
    %64 = arith.addf %61, %63 : vector<16x256xf32>
    %cst_90 = arith.constant 0.000000e+00 : f32
    %65 = vector.broadcast %cst_90 : f32 to vector<16x256xf32>
    %66 = arith.cmpf oge, %64, %65 : vector<16x256xf32>
    %cst_91 = arith.constant 2.000000e-01 : f32
    %67 = vector.broadcast %cst_91 : f32 to vector<16x256xf32>
    %68 = arith.mulf %67, %64 : vector<16x256xf32>
    %69 = arith.select %66, %64, %68 : vector<16x256xi1>, vector<16x256xf32>
    %c0_92 = arith.constant 0 : index
    %c0_93 = arith.constant 0 : index
    %70 = vector.load %arg12[%c0_92, %c0_93] : memref<16x384xf32, #tpu.memory_space<vmem>>, vector<16x256xf32>
    tpu.vector_store %arg12[%c0_92, %c0_93], %69 {strides = array<i32>} : memref<16x384xf32, #tpu.memory_space<vmem>>, vector<16x256xf32>,
    %c0_94 = arith.constant 0 : index
    %c0_95 = arith.constant 0 : index
    %71 = vector.load %arg12[%c0_94, %c0_95] : memref<16x384xf32, #tpu.memory_space<vmem>>, vector<16x256xf32>
    %c0_96 = arith.constant 0 : index
    %c0_97 = arith.constant 0 : index
    %72 = vector.load %arg14[%c0_96, %c0_97] : memref<288x256xf32, #tpu.memory_space<vmem>>, vector<16x256xf32>
    tpu.vector_store %arg14[%c0_96, %c0_97], %71 {strides = array<i32>} : memref<288x256xf32, #tpu.memory_space<vmem>>, vector<16x256xf32>,
    %c0_98 = arith.constant 0 : index
    %c1_99 = arith.constant 1 : index
    %73 = vector.load %arg12[%c0_98, %c1_99] : memref<16x384xf32, #tpu.memory_space<vmem>>, vector<16x256xf32>
    %c16_100 = arith.constant 16 : index
    %c0_101 = arith.constant 0 : index
    %74 = vector.load %arg14[%c16_100, %c0_101] : memref<288x256xf32, #tpu.memory_space<vmem>>, vector<16x256xf32>
    tpu.vector_store %arg14[%c16_100, %c0_101], %73 {strides = array<i32>} : memref<288x256xf32, #tpu.memory_space<vmem>>, vector<16x256xf32>,
    %c0_102 = arith.constant 0 : index
    %c2_103 = arith.constant 2 : index
    %75 = vector.load %arg12[%c0_102, %c2_103] : memref<16x384xf32, #tpu.memory_space<vmem>>, vector<16x256xf32>
    %c32_104 = arith.constant 32 : index
    %c0_105 = arith.constant 0 : index
    %76 = vector.load %arg14[%c32_104, %c0_105] : memref<288x256xf32, #tpu.memory_space<vmem>>, vector<16x256xf32>
    tpu.vector_store %arg14[%c32_104, %c0_105], %75 {strides = array<i32>} : memref<288x256xf32, #tpu.memory_space<vmem>>, vector<16x256xf32>,
    %c0_106 = arith.constant 0 : index
    %c16_107 = arith.constant 16 : index
    %77 = vector.load %arg12[%c0_106, %c16_107] : memref<16x384xf32, #tpu.memory_space<vmem>>, vector<16x256xf32>
    %c48_108 = arith.constant 48 : index
    %c0_109 = arith.constant 0 : index
    %78 = vector.load %arg14[%c48_108, %c0_109] : memref<288x256xf32, #tpu.memory_space<vmem>>, vector<16x256xf32>
    tpu.vector_store %arg14[%c48_108, %c0_109], %77 {strides = array<i32>} : memref<288x256xf32, #tpu.memory_space<vmem>>, vector<16x256xf32>,
    %c0_110 = arith.constant 0 : index
    %c17_111 = arith.constant 17 : index
    %79 = vector.load %arg12[%c0_110, %c17_111] : memref<16x384xf32, #tpu.memory_space<vmem>>, vector<16x256xf32>
    %c64_112 = arith.constant 64 : index
    %c0_113 = arith.constant 0 : index
    %80 = vector.load %arg14[%c64_112, %c0_113] : memref<288x256xf32, #tpu.memory_space<vmem>>, vector<16x256xf32>
    tpu.vector_store %arg14[%c64_112, %c0_113], %79 {strides = array<i32>} : memref<288x256xf32, #tpu.memory_space<vmem>>, vector<16x256xf32>,
    %c0_114 = arith.constant 0 : index
    %c18_115 = arith.constant 18 : index
    %81 = vector.load %arg12[%c0_114, %c18_115] : memref<16x384xf32, #tpu.memory_space<vmem>>, vector<16x256xf32>
    %c80 = arith.constant 80 : index
    %c0_116 = arith.constant 0 : index
    %82 = vector.load %arg14[%c80, %c0_116] : memref<288x256xf32, #tpu.memory_space<vmem>>, vector<16x256xf32>
    tpu.vector_store %arg14[%c80, %c0_116], %81 {strides = array<i32>} : memref<288x256xf32, #tpu.memory_space<vmem>>, vector<16x256xf32>,
    %c0_117 = arith.constant 0 : index
    %c32_118 = arith.constant 32 : index
    %83 = vector.load %arg12[%c0_117, %c32_118] : memref<16x384xf32, #tpu.memory_space<vmem>>, vector<16x256xf32>
    %c96 = arith.constant 96 : index
    %c0_119 = arith.constant 0 : index
    %84 = vector.load %arg14[%c96, %c0_119] : memref<288x256xf32, #tpu.memory_space<vmem>>, vector<16x256xf32>
    tpu.vector_store %arg14[%c96, %c0_119], %83 {strides = array<i32>} : memref<288x256xf32, #tpu.memory_space<vmem>>, vector<16x256xf32>,
    %c0_120 = arith.constant 0 : index
    %c33_121 = arith.constant 33 : index
    %85 = vector.load %arg12[%c0_120, %c33_121] : memref<16x384xf32, #tpu.memory_space<vmem>>, vector<16x256xf32>
    %c112 = arith.constant 112 : index
    %c0_122 = arith.constant 0 : index
    %86 = vector.load %arg14[%c112, %c0_122] : memref<288x256xf32, #tpu.memory_space<vmem>>, vector<16x256xf32>
    tpu.vector_store %arg14[%c112, %c0_122], %85 {strides = array<i32>} : memref<288x256xf32, #tpu.memory_space<vmem>>, vector<16x256xf32>,
    %c0_123 = arith.constant 0 : index
    %c34_124 = arith.constant 34 : index
    %87 = vector.load %arg12[%c0_123, %c34_124] : memref<16x384xf32, #tpu.memory_space<vmem>>, vector<16x256xf32>
    %c128 = arith.constant 128 : index
    %c0_125 = arith.constant 0 : index
    %88 = vector.load %arg14[%c128, %c0_125] : memref<288x256xf32, #tpu.memory_space<vmem>>, vector<16x256xf32>
    tpu.vector_store %arg14[%c128, %c0_125], %87 {strides = array<i32>} : memref<288x256xf32, #tpu.memory_space<vmem>>, vector<16x256xf32>,
    %c0_126 = arith.constant 0 : index
    %c0_127 = arith.constant 0 : index
    %89 = vector.load %arg4[%c0_126, %c0_127] : memref<32x144xf32, #tpu.memory_space<vmem>>, vector<32x144xf32>
    %c0_128 = arith.constant 0 : index
    %c0_129 = arith.constant 0 : index
    %90 = vector.load %arg14[%c0_128, %c0_129] : memref<288x256xf32, #tpu.memory_space<vmem>>, vector<144x256xf32>
    %cst_130 = arith.constant dense<0.000000e+00> : vector<32x256xf32>
    %91 = tpu.matmul %89, %90, %cst_130 {dimension_numbers = #tpu.dot_dimension_numbers<[1], [0], [0], [1], [0, 0, 1, 1], [], []>} : vector<32x144xf32>, vector<144x256xf32>, vector<32x256xf32> -> vector<32x256xf32>
    %c0_131 = arith.constant 0 : index
    %c0_132 = arith.constant 0 : index
    %92 = vector.load %arg8[%c0_131, %c0_132] : memref<32x1xf32, #tpu.memory_space<vmem>>, vector<32x1xf32>
    %93 = vector.broadcast %92 : vector<32x1xf32> to vector<32x256xf32>
    %94 = arith.addf %91, %93 : vector<32x256xf32>
    %cst_133 = arith.constant 0.000000e+00 : f32
    %95 = vector.broadcast %cst_133 : f32 to vector<32x256xf32>
    %96 = arith.cmpf oge, %94, %95 : vector<32x256xf32>
    %cst_134 = arith.constant 2.000000e-01 : f32
    %97 = vector.broadcast %cst_134 : f32 to vector<32x256xf32>
    %98 = arith.mulf %97, %94 : vector<32x256xf32>
    %99 = arith.select %96, %94, %98 : vector<32x256xi1>, vector<32x256xf32>
    %c0_135 = arith.constant 0 : index
    %c0_136 = arith.constant 0 : index
    %100 = vector.load %arg13[%c0_135, %c0_136] : memref<32x384xf32, #tpu.memory_space<vmem>>, vector<32x256xf32>
    tpu.vector_store %arg13[%c0_135, %c0_136], %99 {strides = array<i32>} : memref<32x384xf32, #tpu.memory_space<vmem>>, vector<32x256xf32>,
    %c0_137 = arith.constant 0 : index
    %c0_138 = arith.constant 0 : index
    %101 = vector.load %arg13[%c0_137, %c0_138] : memref<32x384xf32, #tpu.memory_space<vmem>>, vector<32x256xf32>
    %c0_139 = arith.constant 0 : index
    %c0_140 = arith.constant 0 : index
    %102 = vector.load %arg14[%c0_139, %c0_140] : memref<288x256xf32, #tpu.memory_space<vmem>>, vector<32x256xf32>
    tpu.vector_store %arg14[%c0_139, %c0_140], %101 {strides = array<i32>} : memref<288x256xf32, #tpu.memory_space<vmem>>, vector<32x256xf32>,
    %c0_141 = arith.constant 0 : index
    %c1_142 = arith.constant 1 : index
    %103 = vector.load %arg13[%c0_141, %c1_142] : memref<32x384xf32, #tpu.memory_space<vmem>>, vector<32x256xf32>
    %c32_143 = arith.constant 32 : index
    %c0_144 = arith.constant 0 : index
    %104 = vector.load %arg14[%c32_143, %c0_144] : memref<288x256xf32, #tpu.memory_space<vmem>>, vector<32x256xf32>
    tpu.vector_store %arg14[%c32_143, %c0_144], %103 {strides = array<i32>} : memref<288x256xf32, #tpu.memory_space<vmem>>, vector<32x256xf32>,
    %c0_145 = arith.constant 0 : index
    %c2_146 = arith.constant 2 : index
    %105 = vector.load %arg13[%c0_145, %c2_146] : memref<32x384xf32, #tpu.memory_space<vmem>>, vector<32x256xf32>
    %c64_147 = arith.constant 64 : index
    %c0_148 = arith.constant 0 : index
    %106 = vector.load %arg14[%c64_147, %c0_148] : memref<288x256xf32, #tpu.memory_space<vmem>>, vector<32x256xf32>
    tpu.vector_store %arg14[%c64_147, %c0_148], %105 {strides = array<i32>} : memref<288x256xf32, #tpu.memory_space<vmem>>, vector<32x256xf32>,
    %c0_149 = arith.constant 0 : index
    %c16_150 = arith.constant 16 : index
    %107 = vector.load %arg13[%c0_149, %c16_150] : memref<32x384xf32, #tpu.memory_space<vmem>>, vector<32x256xf32>
    %c96_151 = arith.constant 96 : index
    %c0_152 = arith.constant 0 : index
    %108 = vector.load %arg14[%c96_151, %c0_152] : memref<288x256xf32, #tpu.memory_space<vmem>>, vector<32x256xf32>
    tpu.vector_store %arg14[%c96_151, %c0_152], %107 {strides = array<i32>} : memref<288x256xf32, #tpu.memory_space<vmem>>, vector<32x256xf32>,
    %c0_153 = arith.constant 0 : index
    %c17_154 = arith.constant 17 : index
    %109 = vector.load %arg13[%c0_153, %c17_154] : memref<32x384xf32, #tpu.memory_space<vmem>>, vector<32x256xf32>
    %c128_155 = arith.constant 128 : index
    %c0_156 = arith.constant 0 : index
    %110 = vector.load %arg14[%c128_155, %c0_156] : memref<288x256xf32, #tpu.memory_space<vmem>>, vector<32x256xf32>
    tpu.vector_store %arg14[%c128_155, %c0_156], %109 {strides = array<i32>} : memref<288x256xf32, #tpu.memory_space<vmem>>, vector<32x256xf32>,
    %c0_157 = arith.constant 0 : index
    %c18_158 = arith.constant 18 : index
    %111 = vector.load %arg13[%c0_157, %c18_158] : memref<32x384xf32, #tpu.memory_space<vmem>>, vector<32x256xf32>
    %c160 = arith.constant 160 : index
    %c0_159 = arith.constant 0 : index
    %112 = vector.load %arg14[%c160, %c0_159] : memref<288x256xf32, #tpu.memory_space<vmem>>, vector<32x256xf32>
    tpu.vector_store %arg14[%c160, %c0_159], %111 {strides = array<i32>} : memref<288x256xf32, #tpu.memory_space<vmem>>, vector<32x256xf32>,
    %c0_160 = arith.constant 0 : index
    %c32_161 = arith.constant 32 : index
    %113 = vector.load %arg13[%c0_160, %c32_161] : memref<32x384xf32, #tpu.memory_space<vmem>>, vector<32x256xf32>
    %c192 = arith.constant 192 : index
    %c0_162 = arith.constant 0 : index
    %114 = vector.load %arg14[%c192, %c0_162] : memref<288x256xf32, #tpu.memory_space<vmem>>, vector<32x256xf32>
    tpu.vector_store %arg14[%c192, %c0_162], %113 {strides = array<i32>} : memref<288x256xf32, #tpu.memory_space<vmem>>, vector<32x256xf32>,
    %c0_163 = arith.constant 0 : index
    %c33_164 = arith.constant 33 : index
    %115 = vector.load %arg13[%c0_163, %c33_164] : memref<32x384xf32, #tpu.memory_space<vmem>>, vector<32x256xf32>
    %c224 = arith.constant 224 : index
    %c0_165 = arith.constant 0 : index
    %116 = vector.load %arg14[%c224, %c0_165] : memref<288x256xf32, #tpu.memory_space<vmem>>, vector<32x256xf32>
    tpu.vector_store %arg14[%c224, %c0_165], %115 {strides = array<i32>} : memref<288x256xf32, #tpu.memory_space<vmem>>, vector<32x256xf32>,
    %c0_166 = arith.constant 0 : index
    %c34_167 = arith.constant 34 : index
    %117 = vector.load %arg13[%c0_166, %c34_167] : memref<32x384xf32, #tpu.memory_space<vmem>>, vector<32x256xf32>
    %c256_168 = arith.constant 256 : index
    %c0_169 = arith.constant 0 : index
    %118 = vector.load %arg14[%c256_168, %c0_169] : memref<288x256xf32, #tpu.memory_space<vmem>>, vector<32x256xf32>
    tpu.vector_store %arg14[%c256_168, %c0_169], %117 {strides = array<i32>} : memref<288x256xf32, #tpu.memory_space<vmem>>, vector<32x256xf32>,
    %c0_170 = arith.constant 0 : index
    %c0_171 = arith.constant 0 : index
    %119 = vector.load %arg5[%c0_170, %c0_171] : memref<64x288xf32, #tpu.memory_space<vmem>>, vector<64x288xf32>
    %c0_172 = arith.constant 0 : index
    %c0_173 = arith.constant 0 : index
    %120 = vector.load %arg14[%c0_172, %c0_173] : memref<288x256xf32, #tpu.memory_space<vmem>>, vector<288x256xf32>
    %cst_174 = arith.constant dense<0.000000e+00> : vector<64x256xf32>
    %121 = tpu.matmul %119, %120, %cst_174 {dimension_numbers = #tpu.dot_dimension_numbers<[1], [0], [0], [1], [0, 0, 1, 1], [], []>} : vector<64x288xf32>, vector<288x256xf32>, vector<64x256xf32> -> vector<64x256xf32>
    %cst_175 = arith.constant 0.000000e+00 : f32
    %122 = vector.broadcast %cst_175 : f32 to vector<64x256xf32>
    %123 = arith.cmpf oge, %121, %122 : vector<64x256xf32>
    %cst_176 = arith.constant 2.000000e-01 : f32
    %124 = vector.broadcast %cst_176 : f32 to vector<64x256xf32>
    %125 = arith.mulf %124, %121 : vector<64x256xf32>
    %126 = arith.select %123, %121, %125 : vector<64x256xi1>, vector<64x256xf32>
    %c0_177 = arith.constant 0 : index
    %c0_178 = arith.constant 0 : index
    %c0_179 = arith.constant 0 : index
    %127 = vector.load %arg9[%c0_177, %c0_178, %c0_179] : memref<1x64x256xf32, #tpu.memory_space<vmem>>, vector<1x64x256xf32>
    %128 = vector.shape_cast %127 : vector<1x64x256xf32> to vector<64x256xf32>
    %129 = vector.shape_cast %126 : vector<64x256xf32> to vector<1x64x256xf32>
    tpu.vector_store %arg9[%c0_177, %c0_178, %c0_179], %129 {strides = array<i32>} : memref<1x64x256xf32, #tpu.memory_space<vmem>>, vector<1x64x256xf32>,
    return
  }
  func.func @transform_0(%arg0: i32) -> (i32, i32, i32) {
    %c0_i32 = arith.constant 0 : i32
    %c0_i32_0 = arith.constant 0 : i32
    %c0_i32_1 = arith.constant 0 : i32
    return %arg0, %c0_i32, %c0_i32_0 : i32, i32, i32
  }
  func.func @transform_1(%arg0: i32) -> (i32, i32) {
    %c0_i32 = arith.constant 0 : i32
    %c0_i32_0 = arith.constant 0 : i32
    %c0_i32_1 = arith.constant 0 : i32
    return %c0_i32, %c0_i32_0 : i32, i32
  }
  func.func @transform_2(%arg0: i32) -> (i32, i32) {
    %c0_i32 = arith.constant 0 : i32
    %c0_i32_0 = arith.constant 0 : i32
    %c0_i32_1 = arith.constant 0 : i32
    return %c0_i32, %c0_i32_0 : i32, i32
  }
  func.func @transform_3(%arg0: i32) -> (i32, i32) {
    %c0_i32 = arith.constant 0 : i32
    %c0_i32_0 = arith.constant 0 : i32
    %c0_i32_1 = arith.constant 0 : i32
    return %c0_i32, %c0_i32_0 : i32, i32
  }
  func.func @transform_4(%arg0: i32) -> (i32, i32) {
    %c0_i32 = arith.constant 0 : i32
    %c0_i32_0 = arith.constant 0 : i32
    %c0_i32_1 = arith.constant 0 : i32
    return %c0_i32, %c0_i32_0 : i32, i32
  }
  func.func @transform_5(%arg0: i32) -> (i32, i32) {
    %c0_i32 = arith.constant 0 : i32
    %c0_i32_0 = arith.constant 0 : i32
    %c0_i32_1 = arith.constant 0 : i32
    return %c0_i32, %c0_i32_0 : i32, i32
  }
  func.func @transform_6(%arg0: i32) -> (i32, i32) {
    %c0_i32 = arith.constant 0 : i32
    %c0_i32_0 = arith.constant 0 : i32
    %c0_i32_1 = arith.constant 0 : i32
    return %c0_i32, %c0_i32_0 : i32, i32
  }
  func.func @transform_7(%arg0: i32) -> (i32, i32) {
    %c0_i32 = arith.constant 0 : i32
    %c0_i32_0 = arith.constant 0 : i32
    %c0_i32_1 = arith.constant 0 : i32
    return %c0_i32, %c0_i32_0 : i32, i32
  }
  func.func @transform_8(%arg0: i32) -> (i32, i32, i32) {
    %c0_i32 = arith.constant 0 : i32
    %c0_i32_0 = arith.constant 0 : i32
    %c0_i32_1 = arith.constant 0 : i32
    return %arg0, %c0_i32, %c0_i32_0 : i32, i32, i32
  }
}

</mosaic_0001>

<llo_original>
// kernel: latent4lsnd_forward.1
$region0: #{latent4lsnd_forward.1}
  #allocation0 [shape = 'u32[]', space=smem, size = 0x4, offset = 0x4, fixed_abs, tag = 'smem constant byte address 0x4 - core index']
  #allocation1 [shape = 'u32[144,128]{1,0:T(1,128)}', space=vmem, size = 0x12000, scoped, tag = 'internal scratch']
  #allocation2 [shape = 'f32[8,384]{1,0:T(8,128)}', space=vmem, size = 0x3000, scoped, tag = 'scratch operand']
  #allocation3 [shape = 'f32[8,384]{1,0:T(8,128)}', space=vmem, size = 0x3000, scoped, tag = 'scratch operand']
  #allocation4 [shape = 'f32[16,384]{1,0:T(8,128)}', space=vmem, size = 0x6000, scoped, tag = 'scratch operand']
  #allocation5 [shape = 'f32[32,384]{1,0:T(8,128)}', space=vmem, size = 0xc000, scoped, tag = 'scratch operand']
  #allocation6 [shape = 'f32[288,256]{1,0:T(8,128)}', space=vmem, size = 0x48000, scoped, tag = 'scratch operand']
  %s0 = inlined_call_operand.vmem [shape: f32[2,2,256], index: 0, kind: input, shape index: {}]
  %s1 = inlined_call_operand.hbm [shape: f32[8,72], index: 1, kind: input, shape index: {}]
  %s2 = inlined_call_operand.vmem [shape: f32[16,72], index: 2, kind: input, shape index: {}]
  %s3 = inlined_call_operand.vmem [shape: f32[32,144], index: 3, kind: input, shape index: {}]
  %s4 = inlined_call_operand.vmem [shape: f32[64,288], index: 4, kind: input, shape index: {}]
  %s5 = inlined_call_operand.vmem [shape: f32[8,1], index: 5, kind: input, shape index: {}]
  %s6 = inlined_call_operand.vmem [shape: f32[16,1], index: 6, kind: input, shape index: {}]
  %s7 = inlined_call_operand.vmem [shape: f32[32,1], index: 7, kind: input, shape index: {}]
  %s8 = inlined_call_operand.vmem [shape: f32[2,64,256], index: 8, kind: output, shape index: {}]
  %s9 = sld [smem:[#allocation0]]
  $region69: #{latent4lsnd_forward.1} parent=0
    _
  %s11 = ssub.s32 1, %s9
  %s12 = scalar_select 0, %s11, %s9
  $region1: #{latent4lsnd_forward.1} parent=0
    #allocation7 [shape = 'u8[4096]{0}', space=vmem, size = 0x1000, scoped, tag = 'input window, operand 1, single buffered']
    #allocation8 [shape = 's32[2]{0}', space=sflag, size = 0x8, scoped, tag = 'scoped memory for latent4lsnd_forward.1']
    %13 = vsyncpa [#allocation8], 0
    loop: start=0, step=1, limit=4
    $region2: #{latent4lsnd_forward.1} parent=1 // loop_pre_header
      _
    $region3: #{latent4lsnd_forward.1} parent=1 // loop_header
      %s15 = sphi 0, %s19
      %p16 = scmp.ge.s32.totalorder %s15, 4
      %s25 = sphi 0, %s27
      %s28 = sphi 0, %s25
      %s29 = sphi 0, %s28
      %s45 = sphi 0, %s29
      %s49 = sphi 0, %s49
      %s51 = sphi 0, %s49
      %s52 = sphi 0, %s51
      %s66 = sphi 0, %s52
      %s70 = sphi 0, %s70
      %s72 = sphi 0, %s70
      %s73 = sphi 0, %s72
      %s87 = sphi 0, %s73
      %s91 = sphi 0, %s91
      %s93 = sphi 0, %s91
      %s94 = sphi 0, %s93
      %s108 = sphi 0, %s94
      %s112 = sphi 0, %s112
      %s114 = sphi 0, %s112
      %s115 = sphi 0, %s114
      %s129 = sphi 0, %s115
      %s133 = sphi 0, %s133
      %s135 = sphi 0, %s133
      %s136 = sphi 0, %s135
      %s150 = sphi 0, %s136
      %s154 = sphi 0, %s154
      %s156 = sphi 0, %s154
      %s157 = sphi 0, %s156
      %s171 = sphi 0, %s157
      %s175 = sphi 0, %s175
      %s177 = sphi 0, %s175
      %s178 = sphi 0, %s177
      %s192 = sphi 0, %s178
      %s198 = sphi 0, %s200
      %s201 = sphi 0, %s198
      %s202 = sphi 0, %s201
      %s218 = sphi 0, %s202
    $region4: #{latent4lsnd_forward.1} parent=1 // loop_header_branch
      %18 = sbr.rel (%p16) target = $region8
    $region5: #{latent4lsnd_forward.1} parent=1 // loop_body
      %s20 = ssub.s32 %s15, 1
      %s21 = ssub.s32 %s15, 2
      %s22 = sadd.s32 %s15, 1
      %s23 = ssub.s32 %s15, %s22
      %p24 = scmp.eq.s32.totalorder %s23, 0
      %s26 = sadd.s32 %s25, 1
      %s27 = scalar_select %p24, %s25, %s26
      %p30 = pneg %p24
      %p31 = scmp.eq.s32.totalorder %s15, 1
      %p32 = por %p30, %p31
      %p33 = scmp.ne.s32.totalorder %s25, %s28
      %p34 = scmp.eq.s32.totalorder %s15, 0
      %p35 = por %p33, %p34
      %p36 = scmp.ne.s32.totalorder %s25, %s28
      %p37 = scmp.eq.s32.totalorder %s20, 1
      %p38 = por %p36, %p37
      %p39 = scmp.ne.s32.totalorder %s28, %s29
      %p40 = scmp.eq.s32.totalorder %s20, 0
      %p41 = por %p39, %p40
      %p42 = scmp.ne.s32.totalorder %s28, %s29
      %p43 = scmp.eq.s32.totalorder %s21, 1
      %p44 = por %p42, %p43
      %p46 = scmp.ne.s32.totalorder %s29, %s45
      %p47 = scmp.eq.s32.totalorder %s21, 0
      %p48 = por %p46, %p47
      %s50 = sadd.s32 %s49, 1
      %p53 = scmp.eq.s32.totalorder %s15, 1
      %p54 = scmp.ne.s32.totalorder %s49, %s51
      %p55 = scmp.eq.s32.totalorder %s15, 0
      %p56 = por %p54, %p55
      %p57 = scmp.ne.s32.totalorder %s49, %s51
      %p58 = scmp.eq.s32.totalorder %s20, 1
      %p59 = por %p57, %p58
      %p60 = scmp.ne.s32.totalorder %s51, %s52
      %p61 = scmp.eq.s32.totalorder %s20, 0
      %p62 = por %p60, %p61
      %p63 = scmp.ne.s32.totalorder %s51, %s52
      %p64 = scmp.eq.s32.totalorder %s21, 1
      %p65 = por %p63, %p64
      %p67 = scmp.ne.s32.totalorder %s52, %s66
      %p68 = scmp.eq.s32.totalorder %s21, 0
      %p69 = por %p67, %p68
      %s71 = sadd.s32 %s70, 1
      %p74 = scmp.eq.s32.totalorder %s15, 1
      %p75 = scmp.ne.s32.totalorder %s70, %s72
      %p76 = scmp.eq.s32.totalorder %s15, 0
      %p77 = por %p75, %p76
      %p78 = scmp.ne.s32.totalorder %s70, %s72
      %p79 = scmp.eq.s32.totalorder %s20, 1
      %p80 = por %p78, %p79
      %p81 = scmp.ne.s32.totalorder %s72, %s73
      %p82 = scmp.eq.s32.totalorder %s20, 0
      %p83 = por %p81, %p82
      %p84 = scmp.ne.s32.totalorder %s72, %s73
      %p85 = scmp.eq.s32.totalorder %s21, 1
      %p86 = por %p84, %p85
      %p88 = scmp.ne.s32.totalorder %s73, %s87
      %p89 = scmp.eq.s32.totalorder %s21, 0
      %p90 = por %p88, %p89
      %s92 = sadd.s32 %s91, 1
      %p95 = scmp.eq.s32.totalorder %s15, 1
      %p96 = scmp.ne.s32.totalorder %s91, %s93
      %p97 = scmp.eq.s32.totalorder %s15, 0
      %p98 = por %p96, %p97
      %p99 = scmp.ne.s32.totalorder %s91, %s93
      %p100 = scmp.eq.s32.totalorder %s20, 1
      %p101 = por %p99, %p100
      %p102 = scmp.ne.s32.totalorder %s93, %s94
      %p103 = scmp.eq.s32.totalorder %s20, 0
      %p104 = por %p102, %p103
      %p105 = scmp.ne.s32.totalorder %s93, %s94
      %p106 = scmp.eq.s32.totalorder %s21, 1
      %p107 = por %p105, %p106
      %p109 = scmp.ne.s32.totalorder %s94, %s108
      %p110 = scmp.eq.s32.totalorder %s21, 0
      %p111 = por %p109, %p110
      %s113 = sadd.s32 %s112, 1
      %p116 = scmp.eq.s32.totalorder %s15, 1
      %p117 = scmp.ne.s32.totalorder %s112, %s114
      %p118 = scmp.eq.s32.totalorder %s15, 0
      %p119 = por %p117, %p118
      %p120 = scmp.ne.s32.totalorder %s112, %s114
      %p121 = scmp.eq.s32.totalorder %s20, 1
      %p122 = por %p120, %p121
      %p123 = scmp.ne.s32.totalorder %s114, %s115
      %p124 = scmp.eq.s32.totalorder %s20, 0
      %p125 = por %p123, %p124
      %p126 = scmp.ne.s32.totalorder %s114, %s115
      %p127 = scmp.eq.s32.totalorder %s21, 1
      %p128 = por %p126, %p127
      %p130 = scmp.ne.s32.totalorder %s115, %s129
      %p131 = scmp.eq.s32.totalorder %s21, 0
      %p132 = por %p130, %p131
      %s134 = sadd.s32 %s133, 1
      %p137 = scmp.eq.s32.totalorder %s15, 1
      %p138 = scmp.ne.s32.totalorder %s133, %s135
      %p139 = scmp.eq.s32.totalorder %s15, 0
      %p140 = por %p138, %p139
      %p141 = scmp.ne.s32.totalorder %s133, %s135
      %p142 = scmp.eq.s32.totalorder %s20, 1
      %p143 = por %p141, %p142
      %p144 = scmp.ne.s32.totalorder %s135, %s136
      %p145 = scmp.eq.s32.totalorder %s20, 0
      %p146 = por %p144, %p145
      %p147 = scmp.ne.s32.totalorder %s135, %s136
      %p148 = scmp.eq.s32.totalorder %s21, 1
      %p149 = por %p147, %p148
      %p151 = scmp.ne.s32.totalorder %s136, %s150
      %p152 = scmp.eq.s32.totalorder %s21, 0
      %p153 = por %p151, %p152
      %s155 = sadd.s32 %s154, 1
      %p158 = scmp.eq.s32.totalorder %s15, 1
      %p159 = scmp.ne.s32.totalorder %s154, %s156
      %p160 = scmp.eq.s32.totalorder %s15, 0
      %p161 = por %p159, %p160
      %p162 = scmp.ne.s32.totalorder %s154, %s156
      %p163 = scmp.eq.s32.totalorder %s20, 1
      %p164 = por %p162, %p163
      %p165 = scmp.ne.s32.totalorder %s156, %s157
      %p166 = scmp.eq.s32.totalorder %s20, 0
      %p167 = por %p165, %p166
      %p168 = scmp.ne.s32.totalorder %s156, %s157
      %p169 = scmp.eq.s32.totalorder %s21, 1
      %p170 = por %p168, %p169
      %p172 = scmp.ne.s32.totalorder %s157, %s171
      %p173 = scmp.eq.s32.totalorder %s21, 0
      %p174 = por %p172, %p173
      %s176 = sadd.s32 %s175, 1
      %p179 = scmp.eq.s32.totalorder %s15, 1
      %p180 = scmp.ne.s32.totalorder %s175, %s177
      %p181 = scmp.eq.s32.totalorder %s15, 0
      %p182 = por %p180, %p181
      %p183 = scmp.ne.s32.totalorder %s175, %s177
      %p184 = scmp.eq.s32.totalorder %s20, 1
      %p185 = por %p183, %p184
      %p186 = scmp.ne.s32.totalorder %s177, %s178
      %p187 = scmp.eq.s32.totalorder %s20, 0
      %p188 = por %p186, %p187
      %p189 = scmp.ne.s32.totalorder %s177, %s178
      %p190 = scmp.eq.s32.totalorder %s21, 1
      %p191 = por %p189, %p190
      %p193 = scmp.ne.s32.totalorder %s178, %s192
      %p194 = scmp.eq.s32.totalorder %s21, 0
      %p195 = por %p193, %p194
      %s196 = ssub.s32 %s15, %s22
      %p197 = scmp.eq.s32.totalorder %s196, 0
      %s199 = sadd.s32 %s198, 1
      %s200 = scalar_select %p197, %s198, %s199
      %p203 = pneg %p197
      %p204 = scmp.eq.s32.totalorder %s15, 1
      %p205 = por %p203, %p204
      %p206 = scmp.ne.s32.totalorder %s198, %s201
      %p207 = scmp.eq.s32.totalorder %s15, 0
      %p208 = por %p206, %p207
      %p209 = scmp.ne.s32.totalorder %s198, %s201
      %p210 = scmp.eq.s32.totalorder %s20, 1
      %p211 = por %p209, %p210
      %p212 = scmp.ne.s32.totalorder %s201, %s202
      %p213 = scmp.eq.s32.totalorder %s20, 0
      %p214 = por %p212, %p213
      %p215 = scmp.ne.s32.totalorder %s201, %s202
      %p216 = scmp.eq.s32.totalorder %s21, 1
      %p217 = por %p215, %p216
      %p219 = scmp.ne.s32.totalorder %s202, %s218
      %p220 = scmp.eq.s32.totalorder %s21, 0
      %p221 = por %p219, %p220
      %p222 = scmp.le.s32.totalorder 1, %s15
      %p223 = scmp.lt.s32.totalorder %s15, 3
      %p224 = pnand %p222, %p223
      %p225 = pneg %p224
      // Predicated region
      $region9: #{latent4lsnd_forward.1} parent=5 // pred_check
        _
      $region10: #{latent4lsnd_forward.1} parent=5 // pred_check_branch
        %227 = sbr.rel (%p224) target = $region12
      $region11: #{latent4lsnd_forward.1} parent=5 // pred_region
        %s228 = ssub.s32 %s15, 1
        // Predicated region
        $region13: #{latent4lsnd_forward.1} parent=11 // pred_check
          %p229 = pneg %p62
        $region14: #{latent4lsnd_forward.1} parent=11 // pred_check_branch
          %231 = sbr.rel (%p229) target = $region16
        $region15: #{latent4lsnd_forward.1} parent=11 // pred_region
          %s233 = ssub.s32 128, 128
          %234 = vsyncadd [#allocation8], %s233
          %s236 = sshll.u32 [#allocation7], 4
          %s237 = int_to_ptr.vmem [resolvable:$true] %s236
          %239 = dma.hbm_to_vmem [thread:$0]  %s1, 128, %s237, [#allocation8]
        $region16: #{latent4lsnd_forward.1} parent=11 // pred_fallthru
          _
        // Predicated region
        $region17: #{latent4lsnd_forward.1} parent=11 // pred_check
          %p240 = pneg %p83
        $region18: #{latent4lsnd_forward.1} parent=11 // pred_check_branch
          %242 = sbr.rel (%p240) target = $region20
        $region19: #{latent4lsnd_forward.1} parent=11 // pred_region
          _
        $region20: #{latent4lsnd_forward.1} parent=11 // pred_fallthru
          _
        // Predicated region
        $region21: #{latent4lsnd_forward.1} parent=11 // pred_check
          %p243 = pneg %p104
        $region22: #{latent4lsnd_forward.1} parent=11 // pred_check_branch
          %245 = sbr.rel (%p243) target = $region24
        $region23: #{latent4lsnd_forward.1} parent=11 // pred_region
          _
        $region24: #{latent4lsnd_forward.1} parent=11 // pred_fallthru
          _
        // Predicated region
        $region25: #{latent4lsnd_forward.1} parent=11 // pred_check
          %p246 = pneg %p125
        $region26: #{latent4lsnd_forward.1} parent=11 // pred_check_branch
          %248 = sbr.rel (%p246) target = $region28
        $region27: #{latent4lsnd_forward.1} parent=11 // pred_region
          _
        $region28: #{latent4lsnd_forward.1} parent=11 // pred_fallthru
          _
        // Predicated region
        $region29: #{latent4lsnd_forward.1} parent=11 // pred_check
          %p249 = pneg %p146
        $region30: #{latent4lsnd_forward.1} parent=11 // pred_check_branch
          %251 = sbr.rel (%p249) target = $region32
        $region31: #{latent4lsnd_forward.1} parent=11 // pred_region
          _
        $region32: #{latent4lsnd_forward.1} parent=11 // pred_fallthru
          _
        // Predicated region
        $region33: #{latent4lsnd_forward.1} parent=11 // pred_check
          %p252 = pneg %p167
        $region34: #{latent4lsnd_forward.1} parent=11 // pred_check_branch
          %254 = sbr.rel (%p252) target = $region36
        $region35: #{latent4lsnd_forward.1} parent=11 // pred_region
          _
        $region36: #{latent4lsnd_forward.1} parent=11 // pred_fallthru
          _
        // Predicated region
        $region37: #{latent4lsnd_forward.1} parent=11 // pred_check
          %p255 = pneg %p188
        $region38: #{latent4lsnd_forward.1} parent=11 // pred_check_branch
          %257 = sbr.rel (%p255) target = $region40
        $region39: #{latent4lsnd_forward.1} parent=11 // pred_region
          _
        $region40: #{latent4lsnd_forward.1} parent=11 // pred_fallthru
          _
      $region12: #{latent4lsnd_forward.1} parent=5 // pred_fallthru
        _
      %p258 = scmp.lt.s32.totalorder %s15, 2
      // Predicated region
      $region41: #{latent4lsnd_forward.1} parent=5 // pred_check
        %p259 = pneg %p258
      $region42: #{latent4lsnd_forward.1} parent=5 // pred_check_branch
        %261 = sbr.rel (%p259) target = $region44
      $region43: #{latent4lsnd_forward.1} parent=5 // pred_region
        // Predicated region
        $region45: #{latent4lsnd_forward.1} parent=43 // pred_check
          %p262 = pneg %p35
        $region46: #{latent4lsnd_forward.1} parent=43 // pred_check_branch
          %264 = sbr.rel (%p262) target = $region48
        $region47: #{latent4lsnd_forward.1} parent=43 // pred_region
          %p265 = scmp.lt.s32.totalorder %s15, 1
          %s266 = scalar_select %p265, %s15, 1
          %s267 = smul.addr %s266, 2
          %s268 = smul.addr %s267, 2
          %s269 = scalar_lea.vmem %s0, %s268
        $region48: #{latent4lsnd_forward.1} parent=43 // pred_fallthru
          _
      $region44: #{latent4lsnd_forward.1} parent=5 // pred_fallthru
        _
      %p270 = scmp.le.s32.totalorder 1, %s15
      %p271 = scmp.lt.s32.totalorder %s15, 3
      %p272 = pnand %p270, %p271
      %p273 = pneg %p272
      // Predicated region
      $region49: #{latent4lsnd_forward.1} parent=5 // pred_check
        _
      $region50: #{latent4lsnd_forward.1} parent=5 // pred_check_branch
        %275 = sbr.rel (%p272) target = $region52
      $region51: #{latent4lsnd_forward.1} parent=5 // pred_region
        %s276 = ssub.s32 %s15, 1
        // Predicated region
        $region53: #{latent4lsnd_forward.1} parent=51 // pred_check
          %p277 = pneg %p62
        $region54: #{latent4lsnd_forward.1} parent=51 // pred_check_branch
          %279 = sbr.rel (%p277) target = $region56
        $region55: #{latent4lsnd_forward.1} parent=51 // pred_region
          %280 = dma.done [#allocation8], 128
        $region56: #{latent4lsnd_forward.1} parent=51 // pred_fallthru
          _
        %p281 = scmp.lt.s32.totalorder %s20, 1
        %s282 = scalar_select %p281, %s20, 1
        %s283 = smul.addr %s282, 2
        %s284 = smul.addr %s283, 2
        %s285 = scalar_lea.vmem %s0, %s284
        %p286 = pneg %p41
        %p287 = pneg %p38
        %p288 = pneg %p62
        %p289 = pneg %p59
        %p290 = pneg %p83
        %p291 = pneg %p80
        %p292 = pneg %p104
        %p293 = pneg %p101
        %p294 = pneg %p125
        %p295 = pneg %p122
        %p296 = pneg %p146
        %p297 = pneg %p143
        %p298 = pneg %p167
        %p299 = pneg %p164
        %p300 = pneg %p188
        %p301 = pneg %p185
        %p302 = pneg %p214
        %p303 = pneg %p211
        %p304 = scmp.lt.s32.totalorder %s20, 1
        %s305 = scalar_select %p304, %s20, 1
        %s306 = smul.addr %s305, 16
        %s307 = smul.addr %s306, 8
        %s308 = scalar_lea.vmem %s8, %s307
        %p309 = scmp.lt.s32.totalorder %s20, 1
        %s310 = scalar_select %p309, %s20, 1
        %s311 = smul.addr %s310, 2
        %s312 = smul.addr %s311, 2
        %s313 = scalar_lea.vmem %s0, %s312
        %p314 = scmp.lt.s32.totalorder %s20, 1
        %s315 = scalar_select %p314, %s20, 1
        %s316 = smul.addr %s315, 16
        %s317 = smul.addr %s316, 8
        %s318 = scalar_lea.vmem %s8, %s317
        %319 = vst [vmem:[#allocation2] sm:$0xff] 0.0
        %320 = vst [vmem:[#allocation2 + $0x8] sm:$0xff] 0.0
        %321 = vst [vmem:[#allocation2 + $0x10] sm:$0xff] 0.0
        %v322 = vld [vmem:[%s313] sm:$0xf]
        %v325 = vunpack.c.l.s4 1983009808
        %v326 = vunpack.c.0.s8 %v325
        %v327 = vlaneseq
        %v328 = vshrl.u32 %v327, 7
        %v329 = vsub.s32 %v326, %v328
        %v330 = vrot.slane %v322, %v329
        %v331 = vcombine.high %v330, %v330
        %334 = vst [vmem:[#allocation2] sm:$0x3] %v330
        %335 = vst [vmem:[#allocation2 + $0x8] sm:$0x3] %v331
        %336 = vst [vmem:[#allocation3 + $0x10] sm:$0xff] 0.0
        %337 = vst [vmem:[#allocation4 + $0x10] sm:$0xff] 0.0
        %338 = vst [vmem:[#allocation4 + $0x28] sm:$0xff] 0.0
        %339 = vst [vmem:[#allocation5 + $0x10] sm:$0xff] 0.0
        %340 = vst [vmem:[#allocation5 + $0x28] sm:$0xff] 0.0
        %341 = vst [vmem:[#allocation5 + $0x40] sm:$0xff] 0.0
        %342 = vst [vmem:[#allocation5 + $0x58] sm:$0xff] 0.0
        %v343 = vld [vmem:[#allocation2] sm:$0xff]
        %v344 = vld [vmem:[#allocation2 + $0x8] sm:$0xff]
        %345 = vst [vmem:[#allocation6] sm:$0xff] %v343
        %346 = vst [vmem:[#allocation6 + $0x8] sm:$0xff] %v344
        %v347 = vld [vmem:[#allocation2] sm:$0xff]
        %v348 = vld [vmem:[#allocation2 + $0x8] sm:$0xff]
        %v349 = vld [vmem:[#allocation2 + $0x10] sm:$0xff]
        %353 = vrot.lane.b32.xlu0 %v347, 127
        %v354 = vpop.permute.xlu0 %353
        %355 = vrot.lane.b32.xlu0 %v348, 127
        %v356 = vpop.permute.xlu0 %355
        %357 = vrot.lane.b32.xlu0 %v349, 127
        %v358 = vpop.permute.xlu0 %357
        %vm359 = vcmask 1039360
        %v360 = vsel %vm359, %v354, %v356
        %v361 = vsel %vm359, %v356, %v358
        %364 = vst [vmem:[#allocation6 + $0x10] sm:$0xff] %v360
        %365 = vst [vmem:[#allocation6 + $0x18] sm:$0xff] %v361
        %v366 = vld [vmem:[#allocation2] sm:$0xff]
        %v367 = vld [vmem:[#allocation2 + $0x8] sm:$0xff]
        %v368 = vld [vmem:[#allocation2 + $0x10] sm:$0xff]
        %372 = vrot.lane.b32.xlu0 %v366, 126
        %v373 = vpop.permute.xlu0 %372
        %374 = vrot.lane.b32.xlu0 %v367, 126
        %v375 = vpop.permute.xlu0 %374
        %376 = vrot.lane.b32.xlu0 %v368, 126
        %v377 = vpop.permute.xlu0 %376
        %vm378 = vcmask 1031168
        %v379 = vsel %vm378, %v373, %v375
        %v380 = vsel %vm378, %v375, %v377
        %383 = vst [vmem:[#allocation6 + $0x20] sm:$0xff] %v379
        %384 = vst [vmem:[#allocation6 + $0x28] sm:$0xff] %v380
        %v385 = vld [vmem:[#allocation2] sm:$0xff]
        %v386 = vld [vmem:[#allocation2 + $0x8] sm:$0xff]
        %v387 = vld [vmem:[#allocation2 + $0x10] sm:$0xff]
        %391 = vrot.lane.b32.xlu0 %v385, 112
        %v392 = vpop.permute.xlu0 %391
        %393 = vrot.lane.b32.xlu0 %v386, 112
        %v394 = vpop.permute.xlu0 %393
        %395 = vrot.lane.b32.xlu0 %v387, 112
        %v396 = vpop.permute.xlu0 %395
        %vm397 = vcmask 916480
        %v398 = vsel %vm397, %v392, %v394
        %v399 = vsel %vm397, %v394, %v396
        %402 = vst [vmem:[#allocation6 + $0x30] sm:$0xff] %v398
        %403 = vst [vmem:[#allocation6 + $0x38] sm:$0xff] %v399
        %v404 = vld [vmem:[#allocation2] sm:$0xff]
        %v405 = vld [vmem:[#allocation2 + $0x8] sm:$0xff]
        %v406 = vld [vmem:[#allocation2 + $0x10] sm:$0xff]
        %410 = vrot.lane.b32.xlu0 %v404, 111
        %v411 = vpop.permute.xlu0 %410
        %412 = vrot.lane.b32.xlu0 %v405, 111
        %v413 = vpop.permute.xlu0 %412
        %414 = vrot.lane.b32.xlu0 %v406, 111
        %v415 = vpop.permute.xlu0 %414
        %vm416 = vcmask 908288
        %v417 = vsel %vm416, %v411, %v413
        %v418 = vsel %vm416, %v413, %v415
        %421 = vst [vmem:[#allocation6 + $0x40] sm:$0xff] %v417
        %422 = vst [vmem:[#allocation6 + $0x48] sm:$0xff] %v418
        %v423 = vld [vmem:[#allocation2] sm:$0xff]
        %v424 = vld [vmem:[#allocation2 + $0x8] sm:$0xff]
        %v425 = vld [vmem:[#allocation2 + $0x10] sm:$0xff]
        %429 = vrot.lane.b32.xlu0 %v423, 110
        %v430 = vpop.permute.xlu0 %429
        %431 = vrot.lane.b32.xlu0 %v424, 110
        %v432 = vpop.permute.xlu0 %431
        %433 = vrot.lane.b32.xlu0 %v425, 110
        %v434 = vpop.permute.xlu0 %433
        %vm435 = vcmask 900096
        %v436 = vsel %vm435, %v430, %v432
        %v437 = vsel %vm435, %v432, %v434
        %440 = vst [vmem:[#allocation6 + $0x50] sm:$0xff] %v436
        %441 = vst [vmem:[#allocation6 + $0x58] sm:$0xff] %v437
        %v442 = vld [vmem:[#allocation2] sm:$0xff]
        %v443 = vld [vmem:[#allocation2 + $0x8] sm:$0xff]
        %v444 = vld [vmem:[#allocation2 + $0x10] sm:$0xff]
        %448 = vrot.lane.b32.xlu0 %v442, 96
        %v449 = vpop.permute.xlu0 %448
        %450 = vrot.lane.b32.xlu0 %v443, 96
        %v451 = vpop.permute.xlu0 %450
        %452 = vrot.lane.b32.xlu0 %v444, 96
        %v453 = vpop.permute.xlu0 %452
        %vm454 = vcmask 785408
        %v455 = vsel %vm454, %v449, %v451
        %v456 = vsel %vm454, %v451, %v453
        %459 = vst [vmem:[#allocation6 + $0x60] sm:$0xff] %v455
        %460 = vst [vmem:[#allocation6 + $0x68] sm:$0xff] %v456
        %v461 = vld [vmem:[#allocation2] sm:$0xff]
        %v462 = vld [vmem:[#allocation2 + $0x8] sm:$0xff]
        %v463 = vld [vmem:[#allocation2 + $0x10] sm:$0xff]
        %467 = vrot.lane.b32.xlu0 %v461, 95
        %v468 = vpop.permute.xlu0 %467
        %469 = vrot.lane.b32.xlu0 %v462, 95
        %v470 = vpop.permute.xlu0 %469
        %471 = vrot.lane.b32.xlu0 %v463, 95
        %v472 = vpop.permute.xlu0 %471
        %vm473 = vcmask 777216
        %v474 = vsel %vm473, %v468, %v470
        %v475 = vsel %vm473, %v470, %v472
        %478 = vst [vmem:[#allocation6 + $0x70] sm:$0xff] %v474
        %479 = vst [vmem:[#allocation6 + $0x78] sm:$0xff] %v475
        %v480 = vld [vmem:[#allocation2] sm:$0xff]
        %v481 = vld [vmem:[#allocation2 + $0x8] sm:$0xff]
        %v482 = vld [vmem:[#allocation2 + $0x10] sm:$0xff]
        %486 = vrot.lane.b32.xlu0 %v480, 94
        %v487 = vpop.permute.xlu0 %486
        %488 = vrot.lane.b32.xlu0 %v481, 94
        %v489 = vpop.permute.xlu0 %488
        %490 = vrot.lane.b32.xlu0 %v482, 94
        %v491 = vpop.permute.xlu0 %490
        %vm492 = vcmask 769024
        %v493 = vsel %vm492, %v487, %v489
        %v494 = vsel %vm492, %v489, %v491
        %497 = vst [vmem:[#allocation6 + $0x80] sm:$0xff] %v493
        %498 = vst [vmem:[#allocation6 + $0x88] sm:$0xff] %v494
        %v499 = vld [vmem:[#allocation7] sm:$0xff]
        %v500 = vld [vmem:[#allocation6] sm:$0xff]
        %v501 = vld [vmem:[#allocation6 + $0x8] sm:$0xff]
        %v502 = vld [vmem:[#allocation6 + $0x10] sm:$0xff]
        %v503 = vld [vmem:[#allocation6 + $0x18] sm:$0xff]
        %v504 = vld [vmem:[#allocation6 + $0x20] sm:$0xff]
        %v505 = vld [vmem:[#allocation6 + $0x28] sm:$0xff]
        %v506 = vld [vmem:[#allocation6 + $0x30] sm:$0xff]
        %v507 = vld [vmem:[#allocation6 + $0x38] sm:$0xff]
        %v508 = vld [vmem:[#allocation6 + $0x40] sm:$0xff]
        %v509 = vld [vmem:[#allocation6 + $0x48] sm:$0xff]
        %v510 = vld [vmem:[#allocation6 + $0x50] sm:$0xff]
        %v511 = vld [vmem:[#allocation6 + $0x58] sm:$0xff]
        %v512 = vld [vmem:[#allocation6 + $0x60] sm:$0xff]
        %v513 = vld [vmem:[#allocation6 + $0x68] sm:$0xff]
        %v514 = vld [vmem:[#allocation6 + $0x70] sm:$0xff]
        %v515 = vld [vmem:[#allocation6 + $0x78] sm:$0xff]
        %v516 = vld [vmem:[#allocation6 + $0x80] sm:$0xff]
        %v517 = vld [vmem:[#allocation6 + $0x88] sm:$0xff]
        %v518 = vld [vmem:[%s5] sm:$0xff]
        %520 = vset.pattern.permute.xlu0 0
        %521 = vperm.xlu0 %520, %v518
        %v522 = vpop.permute.xlu0 %521
        %vm524 = vcmask 588800
        %v526 = vsel %vm524, %v499, 0
        %528 = vmatprep.subr.mxu0 %v501
        %529 = vmatpush1.msra.mxu0 %v500
        %530 = vmatprep.subr.mxu0 %v503
        %531 = vmatpush1.msra.mxu0 %v502
        %532 = vmatprep.subr.mxu0 %v505
        %533 = vmatpush1.msra.mxu0 %v504
        %534 = vmatprep.subr.mxu0 %v507
        %535 = vmatpush1.msra.mxu0 %v506
        %536 = vmatprep.subr.mxu0 %v509
        %537 = vmatpush1.msra.mxu0 %v508
        %538 = vmatprep.subr.mxu0 %v511
        %539 = vmatpush1.msra.mxu0 %v510
        %540 = vmatprep.subr.mxu0 %v513
        %541 = vmatpush1.msra.mxu0 %v512
        %542 = vmatprep.subr.mxu0 %v515
        %543 = vmatpush1.msra.mxu0 %v514
        %544 = vmatprep.subr.mxu0 %v517
        %545 = vmatpush1.msra.mxu0 %v516
        %546 = vmatprep.subr.mxu0 0.0
        %547 = vmatpush1.msra.mxu0 0.0
        %548 = vmatprep.subr.mxu0 0.0
        %549 = vmatpush1.msra.mxu0 0.0
        %550 = vmatprep.subr.mxu0 0.0
        %551 = vmatpush1.msra.mxu0 0.0
        %552 = vmatprep.subr.mxu0 0.0
        %553 = vmatpush1.msra.mxu0 0.0
        %554 = vmatprep.subr.mxu0 0.0
        %555 = vmatpush1.msra.mxu0 0.0
        %556 = vmatprep.subr.mxu0 0.0
        %557 = vmatpush1.msra.mxu0 0.0
        %558 = vmatprep.subr.mxu0 0.0
        %559 = vmatpush1.msra.mxu0 0.0
        %560 = vmatprep.subr.mxu0 0.0
        %561 = vmatpush1.msra.mxu0 0.0
        %562 = vmatprep.subr.mxu0 0.0
        %563 = vmatpush1.msra.mxu0 0.0
        %564 = vmatprep.subr.mxu0 0.0
        %565 = vmatpush1.msra.mxu0 0.0
        %566 = vmatprep.subr.mxu0 0.0
        %567 = vmatpush1.msra.mxu0 0.0
        %568 = vmatprep.subr.mxu0 0.0
        %569 = vmatpush1.msra.mxu0 0.0
        %570 = vmatprep.subr.mxu0 0.0
        %571 = vmatpush1.msra.mxu0 0.0
        %572 = vmatprep.subr.mxu0 0.0
        %573 = vmatpush1.msra.mxu0 0.0
        %574 = vmatprep.subr.mxu0 0.0
        %575 = vmatpush1.msra.mxu0 0.0
        %576 = vmatprep.subr.mxu0 0.0
        %577 = vmatpush1.msra.mxu0 0.0
        %578 = vmatprep.subr.mxu0 0.0
        %579 = vmatpush1.msra.mxu0 0.0
        %580 = vmatprep.subr.mxu0 0.0
        %581 = vmatpush1.msra.mxu0 0.0
        %582 = vmatprep.subr.mxu0 0.0
        %583 = vmatpush1.msra.mxu0 0.0
        %584 = vmatprep.subr.mxu0 0.0
        %585 = vmatpush1.msra.mxu0 0.0
        %586 = vmatprep.subr.mxu0 0.0
        %587 = vmatpush1.msra.mxu0 0.0
        %588 = vmatprep.subr.mxu0 0.0
        %589 = vmatpush1.msra.mxu0 0.0
        %590 = vmatprep.subr.mxu0 0.0
        %591 = vmatpush1.msra.mxu0 0.0
        %592 = vmatprep.mubr.f32.mxu0 0.0
        %593 = vmatmul.mubr.f32.gmra.mrb[0].mxu0 %v526
        %v594 = vpop.f32.mrb[0].mxu0
        %v595 = vadd.f32 %v522, %v594
        %v596 = vpop.f32.mrb[0].mxu0
        %v597 = vadd.f32 %v522, %v596
        %598 = vdwg.mxu0
        %vm599 = vcmp.ge.f32.partialorder %v595, 0.0
        %vm600 = vcmp.ge.f32.partialorder %v597, 0.0
        %v601 = vmul.f32 %v595, 0.2
        %v602 = vmul.f32 %v597, 0.2
        %v603 = vsel %vm599, %v595, %v601
        %v604 = vsel %vm600, %v597, %v602
        %605 = vst [vmem:[#allocation3] sm:$0xff] %v603
        %606 = vst [vmem:[#allocation3 + $0x8] sm:$0xff] %v604
        %v607 = vld [vmem:[#allocation3] sm:$0xff]
        %v608 = vld [vmem:[#allocation3 + $0x8] sm:$0xff]
        %609 = vst [vmem:[#allocation6] sm:$0xff] %v607
        %610 = vst [vmem:[#allocation6 + $0x8] sm:$0xff] %v608
        %v611 = vld [vmem:[#allocation3] sm:$0xff]
        %v612 = vld [vmem:[#allocation3 + $0x8] sm:$0xff]
        %v613 = vld [vmem:[#allocation3 + $0x10] sm:$0xff]
        %617 = vrot.lane.b32.xlu0 %v611, 127
        %v618 = vpop.permute.xlu0 %617
        %619 = vrot.lane.b32.xlu0 %v612, 127
        %v620 = vpop.permute.xlu0 %619
        %621 = vrot.lane.b32.xlu0 %v613, 127
        %v622 = vpop.permute.xlu0 %621
        %v623 = vsel %vm359, %v618, %v620
        %v624 = vsel %vm359, %v620, %v622
        %627 = vst [vmem:[#allocation6 + $0x10] sm:$0xff] %v623
        %628 = vst [vmem:[#allocation6 + $0x18] sm:$0xff] %v624
        %v629 = vld [vmem:[#allocation3] sm:$0xff]
        %v630 = vld [vmem:[#allocation3 + $0x8] sm:$0xff]
        %v631 = vld [vmem:[#allocation3 + $0x10] sm:$0xff]
        %635 = vrot.lane.b32.xlu0 %v629, 126
        %v636 = vpop.permute.xlu0 %635
        %637 = vrot.lane.b32.xlu0 %v630, 126
        %v638 = vpop.permute.xlu0 %637
        %639 = vrot.lane.b32.xlu0 %v631, 126
        %v640 = vpop.permute.xlu0 %639
        %v641 = vsel %vm378, %v636, %v638
        %v642 = vsel %vm378, %v638, %v640
        %645 = vst [vmem:[#allocation6 + $0x20] sm:$0xff] %v641
        %646 = vst [vmem:[#allocation6 + $0x28] sm:$0xff] %v642
        %v647 = vld [vmem:[#allocation3] sm:$0xff]
        %v648 = vld [vmem:[#allocation3 + $0x8] sm:$0xff]
        %v649 = vld [vmem:[#allocation3 + $0x10] sm:$0xff]
        %653 = vrot.lane.b32.xlu0 %v647, 112
        %v654 = vpop.permute.xlu0 %653
        %655 = vrot.lane.b32.xlu0 %v648, 112
        %v656 = vpop.permute.xlu0 %655
        %657 = vrot.lane.b32.xlu0 %v649, 112
        %v658 = vpop.permute.xlu0 %657
        %v659 = vsel %vm397, %v654, %v656
        %v660 = vsel %vm397, %v656, %v658
        %663 = vst [vmem:[#allocation6 + $0x30] sm:$0xff] %v659
        %664 = vst [vmem:[#allocation6 + $0x38] sm:$0xff] %v660
        %v665 = vld [vmem:[#allocation3] sm:$0xff]
        %v666 = vld [vmem:[#allocation3 + $0x8] sm:$0xff]
        %v667 = vld [vmem:[#allocation3 + $0x10] sm:$0xff]
        %671 = vrot.lane.b32.xlu0 %v665, 111
        %v672 = vpop.permute.xlu0 %671
        %673 = vrot.lane.b32.xlu0 %v666, 111
        %v674 = vpop.permute.xlu0 %673
        %675 = vrot.lane.b32.xlu0 %v667, 111
        %v676 = vpop.permute.xlu0 %675
        %v677 = vsel %vm416, %v672, %v674
        %v678 = vsel %vm416, %v674, %v676
        %681 = vst [vmem:[#allocation6 + $0x40] sm:$0xff] %v677
        %682 = vst [vmem:[#allocation6 + $0x48] sm:$0xff] %v678
        %v683 = vld [vmem:[#allocation3] sm:$0xff]
        %v684 = vld [vmem:[#allocation3 + $0x8] sm:$0xff]
        %v685 = vld [vmem:[#allocation3 + $0x10] sm:$0xff]
        %689 = vrot.lane.b32.xlu0 %v683, 110
        %v690 = vpop.permute.xlu0 %689
        %691 = vrot.lane.b32.xlu0 %v684, 110
        %v692 = vpop.permute.xlu0 %691
        %693 = vrot.lane.b32.xlu0 %v685, 110
        %v694 = vpop.permute.xlu0 %693
        %v695 = vsel %vm435, %v690, %v692
        %v696 = vsel %vm435, %v692, %v694
        %699 = vst [vmem:[#allocation6 + $0x50] sm:$0xff] %v695
        %700 = vst [vmem:[#allocation6 + $0x58] sm:$0xff] %v696
        %v701 = vld [vmem:[#allocation3] sm:$0xff]
        %v702 = vld [vmem:[#allocation3 + $0x8] sm:$0xff]
        %v703 = vld [vmem:[#allocation3 + $0x10] sm:$0xff]
        %707 = vrot.lane.b32.xlu0 %v701, 96
        %v708 = vpop.permute.xlu0 %707
        %709 = vrot.lane.b32.xlu0 %v702, 96
        %v710 = vpop.permute.xlu0 %709
        %711 = vrot.lane.b32.xlu0 %v703, 96
        %v712 = vpop.permute.xlu0 %711
        %v713 = vsel %vm454, %v708, %v710
        %v714 = vsel %vm454, %v710, %v712
        %717 = vst [vmem:[#allocation6 + $0x60] sm:$0xff] %v713
        %718 = vst [vmem:[#allocation6 + $0x68] sm:$0xff] %v714
        %v719 = vld [vmem:[#allocation3] sm:$0xff]
        %v720 = vld [vmem:[#allocation3 + $0x8] sm:$0xff]
        %v721 = vld [vmem:[#allocation3 + $0x10] sm:$0xff]
        %725 = vrot.lane.b32.xlu0 %v719, 95
        %v726 = vpop.permute.xlu0 %725
        %727 = vrot.lane.b32.xlu0 %v720, 95
        %v728 = vpop.permute.xlu0 %727
        %729 = vrot.lane.b32.xlu0 %v721, 95
        %v730 = vpop.permute.xlu0 %729
        %v731 = vsel %vm473, %v726, %v728
        %v732 = vsel %vm473, %v728, %v730
        %735 = vst [vmem:[#allocation6 + $0x70] sm:$0xff] %v731
        %736 = vst [vmem:[#allocation6 + $0x78] sm:$0xff] %v732
        %v737 = vld [vmem:[#allocation3] sm:$0xff]
        %v738 = vld [vmem:[#allocation3 + $0x8] sm:$0xff]
        %v739 = vld [vmem:[#allocation3 + $0x10] sm:$0xff]
        %743 = vrot.lane.b32.xlu0 %v737, 94
        %v744 = vpop.permute.xlu0 %743
        %745 = vrot.lane.b32.xlu0 %v738, 94
        %v746 = vpop.permute.xlu0 %745
        %747 = vrot.lane.b32.xlu0 %v739, 94
        %v748 = vpop.permute.xlu0 %747
        %v749 = vsel %vm492, %v744, %v746
        %v750 = vsel %vm492, %v746, %v748
        %753 = vst [vmem:[#allocation6 + $0x80] sm:$0xff] %v749
        %754 = vst [vmem:[#allocation6 + $0x88] sm:$0xff] %v750
        %v755 = vld [vmem:[%s2] sm:$0xff]
        %v756 = vld [vmem:[%s2 + $0x8] sm:$0xff]
        %v757 = vld [vmem:[#allocation6] sm:$0xff]
        %v758 = vld [vmem:[#allocation6 + $0x8] sm:$0xff]
        %v759 = vld [vmem:[#allocation6 + $0x10] sm:$0xff]
        %v760 = vld [vmem:[#allocation6 + $0x18] sm:$0xff]
        %v761 = vld [vmem:[#allocation6 + $0x20] sm:$0xff]
        %v762 = vld [vmem:[#allocation6 + $0x28] sm:$0xff]
        %v763 = vld [vmem:[#allocation6 + $0x30] sm:$0xff]
        %v764 = vld [vmem:[#allocation6 + $0x38] sm:$0xff]
        %v765 = vld [vmem:[#allocation6 + $0x40] sm:$0xff]
        %v766 = vld [vmem:[#allocation6 + $0x48] sm:$0xff]
        %v767 = vld [vmem:[#allocation6 + $0x50] sm:$0xff]
        %v768 = vld [vmem:[#allocation6 + $0x58] sm:$0xff]
        %v769 = vld [vmem:[#allocation6 + $0x60] sm:$0xff]
        %v770 = vld [vmem:[#allocation6 + $0x68] sm:$0xff]
        %v771 = vld [vmem:[#allocation6 + $0x70] sm:$0xff]
        %v772 = vld [vmem:[#allocation6 + $0x78] sm:$0xff]
        %v773 = vld [vmem:[#allocation6 + $0x80] sm:$0xff]
        %v774 = vld [vmem:[#allocation6 + $0x88] sm:$0xff]
        %v775 = vld [vmem:[%s6] sm:$0xff]
        %v776 = vld [vmem:[%s6 + $0x8] sm:$0xff]
        %778 = vset.pattern.permute.xlu0 0
        %779 = vperm.xlu0 %778, %v775
        %v780 = vpop.permute.xlu0 %779
        %783 = vset.pattern.permute.xlu0 0
        %784 = vperm.xlu0 %783, %v776
        %v785 = vpop.permute.xlu0 %784
        %v788 = vsel %vm524, %v755, 0
        %v791 = vsel %vm524, %v756, 0
        %793 = vmatprep.subr.mxu0 %v758
        %794 = vmatpush1.msra.mxu0 %v757
        %795 = vmatprep.subr.mxu0 %v760
        %796 = vmatpush1.msra.mxu0 %v759
        %797 = vmatprep.subr.mxu0 %v762
        %798 = vmatpush1.msra.mxu0 %v761
        %799 = vmatprep.subr.mxu0 %v764
        %800 = vmatpush1.msra.mxu0 %v763
        %801 = vmatprep.subr.mxu0 %v766
        %802 = vmatpush1.msra.mxu0 %v765
        %803 = vmatprep.subr.mxu0 %v768
        %804 = vmatpush1.msra.mxu0 %v767
        %805 = vmatprep.subr.mxu0 %v770
        %806 = vmatpush1.msra.mxu0 %v769
        %807 = vmatprep.subr.mxu0 %v772
        %808 = vmatpush1.msra.mxu0 %v771
        %809 = vmatprep.subr.mxu0 %v774
        %810 = vmatpush1.msra.mxu0 %v773
        %811 = vmatprep.subr.mxu0 0.0
        %812 = vmatpush1.msra.mxu0 0.0
        %813 = vmatprep.subr.mxu0 0.0
        %814 = vmatpush1.msra.mxu0 0.0
        %815 = vmatprep.subr.mxu0 0.0
        %816 = vmatpush1.msra.mxu0 0.0
        %817 = vmatprep.subr.mxu0 0.0
        %818 = vmatpush1.msra.mxu0 0.0
        %819 = vmatprep.subr.mxu0 0.0
        %820 = vmatpush1.msra.mxu0 0.0
        %821 = vmatprep.subr.mxu0 0.0
        %822 = vmatpush1.msra.mxu0 0.0
        %823 = vmatprep.subr.mxu0 0.0
        %824 = vmatpush1.msra.mxu0 0.0
        %825 = vmatprep.subr.mxu0 0.0
        %826 = vmatpush1.msra.mxu0 0.0
        %827 = vmatprep.subr.mxu0 0.0
        %828 = vmatpush1.msra.mxu0 0.0
        %829 = vmatprep.subr.mxu0 0.0
        %830 = vmatpush1.msra.mxu0 0.0
        %831 = vmatprep.subr.mxu0 0.0
        %832 = vmatpush1.msra.mxu0 0.0
        %833 = vmatprep.subr.mxu0 0.0
        %834 = vmatpush1.msra.mxu0 0.0
        %835 = vmatprep.subr.mxu0 0.0
        %836 = vmatpush1.msra.mxu0 0.0
        %837 = vmatprep.subr.mxu0 0.0
        %838 = vmatpush1.msra.mxu0 0.0
        %839 = vmatprep.subr.mxu0 0.0
        %840 = vmatpush1.msra.mxu0 0.0
        %841 = vmatprep.subr.mxu0 0.0
        %842 = vmatpush1.msra.mxu0 0.0
        %843 = vmatprep.subr.mxu0 0.0
        %844 = vmatpush1.msra.mxu0 0.0
        %845 = vmatprep.subr.mxu0 0.0
        %846 = vmatpush1.msra.mxu0 0.0
        %847 = vmatprep.subr.mxu0 0.0
        %848 = vmatpush1.msra.mxu0 0.0
        %849 = vmatprep.subr.mxu0 0.0
        %850 = vmatpush1.msra.mxu0 0.0
        %851 = vmatprep.subr.mxu0 0.0
        %852 = vmatpush1.msra.mxu0 0.0
        %853 = vmatprep.subr.mxu0 0.0
        %854 = vmatpush1.msra.mxu0 0.0
        %855 = vmatprep.subr.mxu0 0.0
        %856 = vmatpush1.msra.mxu0 0.0
        %857 = vmatprep.mubr.f32.mxu0 0.0
        %858 = vmatmul.mubr.f32.gmra.mrb[0].mxu0 %v788
        %v859 = vpop.f32.mrb[0].mxu0
        %v860 = vadd.f32 %v780, %v859
        %v861 = vpop.f32.mrb[0].mxu0
        %v862 = vadd.f32 %v780, %v861
        %863 = vmatprep.mubr.f32.mxu0 0.0
        %864 = vmatmul.mubr.f32.gmra.mrb[0].mxu0 %v791
        %v865 = vpop.f32.mrb[0].mxu0
        %v866 = vadd.f32 %v785, %v865
        %v867 = vpop.f32.mrb[0].mxu0
        %v868 = vadd.f32 %v785, %v867
        %869 = vdwg.mxu0
        %vm870 = vcmp.ge.f32.partialorder %v860, 0.0
        %vm871 = vcmp.ge.f32.partialorder %v862, 0.0
        %vm872 = vcmp.ge.f32.partialorder %v866, 0.0
        %vm873 = vcmp.ge.f32.partialorder %v868, 0.0
        %v874 = vmul.f32 %v860, 0.2
        %v875 = vmul.f32 %v862, 0.2
        %v876 = vmul.f32 %v866, 0.2
        %v877 = vmul.f32 %v868, 0.2
        %v878 = vsel %vm870, %v860, %v874
        %v879 = vsel %vm871, %v862, %v875
        %v880 = vsel %vm872, %v866, %v876
        %v881 = vsel %vm873, %v868, %v877
        %882 = vst [vmem:[#allocation4] sm:$0xff] %v878
        %883 = vst [vmem:[#allocation4 + $0x8] sm:$0xff] %v879
        %884 = vst [vmem:[#allocation4 + $0x18] sm:$0xff] %v880
        %885 = vst [vmem:[#allocation4 + $0x20] sm:$0xff] %v881
        %v886 = vld [vmem:[#allocation4] sm:$0xff]
        %v887 = vld [vmem:[#allocation4 + $0x8] sm:$0xff]
        %v888 = vld [vmem:[#allocation4 + $0x18] sm:$0xff]
        %v889 = vld [vmem:[#allocation4 + $0x20] sm:$0xff]
        %890 = vst [vmem:[#allocation6] sm:$0xff] %v886
        %891 = vst [vmem:[#allocation6 + $0x8] sm:$0xff] %v887
        %892 = vst [vmem:[#allocation6 + $0x10] sm:$0xff] %v888
        %893 = vst [vmem:[#allocation6 + $0x18] sm:$0xff] %v889
        %v894 = vld [vmem:[#allocation4] sm:$0xff]
        %v895 = vld [vmem:[#allocation4 + $0x8] sm:$0xff]
        %v896 = vld [vmem:[#allocation4 + $0x10] sm:$0xff]
        %v897 = vld [vmem:[#allocation4 + $0x18] sm:$0xff]
        %v898 = vld [vmem:[#allocation4 + $0x20] sm:$0xff]
        %v899 = vld [vmem:[#allocation4 + $0x28] sm:$0xff]
        %906 = vrot.lane.b32.xlu0 %v894, 127
        %v907 = vpop.permute.xlu0 %906
        %908 = vrot.lane.b32.xlu0 %v895, 127
        %v909 = vpop.permute.xlu0 %908
        %910 = vrot.lane.b32.xlu0 %v896, 127
        %v911 = vpop.permute.xlu0 %910
        %912 = vrot.lane.b32.xlu0 %v897, 127
        %v913 = vpop.permute.xlu0 %912
        %914 = vrot.lane.b32.xlu0 %v898, 127
        %v915 = vpop.permute.xlu0 %914
        %916 = vrot.lane.b32.xlu0 %v899, 127
        %v917 = vpop.permute.xlu0 %916
        %v918 = vsel %vm359, %v907, %v909
        %v919 = vsel %vm359, %v909, %v911
        %v920 = vsel %vm359, %v913, %v915
        %v921 = vsel %vm359, %v915, %v917
        %926 = vst [vmem:[#allocation6 + $0x20] sm:$0xff] %v918
        %927 = vst [vmem:[#allocation6 + $0x28] sm:$0xff] %v919
        %928 = vst [vmem:[#allocation6 + $0x30] sm:$0xff] %v920
        %929 = vst [vmem:[#allocation6 + $0x38] sm:$0xff] %v921
        %v930 = vld [vmem:[#allocation4] sm:$0xff]
        %v931 = vld [vmem:[#allocation4 + $0x8] sm:$0xff]
        %v932 = vld [vmem:[#allocation4 + $0x10] sm:$0xff]
        %v933 = vld [vmem:[#allocation4 + $0x18] sm:$0xff]
        %v934 = vld [vmem:[#allocation4 + $0x20] sm:$0xff]
        %v935 = vld [vmem:[#allocation4 + $0x28] sm:$0xff]
        %942 = vrot.lane.b32.xlu0 %v930, 126
        %v943 = vpop.permute.xlu0 %942
        %944 = vrot.lane.b32.xlu0 %v931, 126
        %v945 = vpop.permute.xlu0 %944
        %946 = vrot.lane.b32.xlu0 %v932, 126
        %v947 = vpop.permute.xlu0 %946
        %948 = vrot.lane.b32.xlu0 %v933, 126
        %v949 = vpop.permute.xlu0 %948
        %950 = vrot.lane.b32.xlu0 %v934, 126
        %v951 = vpop.permute.xlu0 %950
        %952 = vrot.lane.b32.xlu0 %v935, 126
        %v953 = vpop.permute.xlu0 %952
        %v954 = vsel %vm378, %v943, %v945
        %v955 = vsel %vm378, %v945, %v947
        %v956 = vsel %vm378, %v949, %v951
        %v957 = vsel %vm378, %v951, %v953
        %962 = vst [vmem:[#allocation6 + $0x40] sm:$0xff] %v954
        %963 = vst [vmem:[#allocation6 + $0x48] sm:$0xff] %v955
        %964 = vst [vmem:[#allocation6 + $0x50] sm:$0xff] %v956
        %965 = vst [vmem:[#allocation6 + $0x58] sm:$0xff] %v957
        %v966 = vld [vmem:[#allocation4] sm:$0xff]
        %v967 = vld [vmem:[#allocation4 + $0x8] sm:$0xff]
        %v968 = vld [vmem:[#allocation4 + $0x10] sm:$0xff]
        %v969 = vld [vmem:[#allocation4 + $0x18] sm:$0xff]
        %v970 = vld [vmem:[#allocation4 + $0x20] sm:$0xff]
        %v971 = vld [vmem:[#allocation4 + $0x28] sm:$0xff]
        %978 = vrot.lane.b32.xlu0 %v966, 112
        %v979 = vpop.permute.xlu0 %978
        %980 = vrot.lane.b32.xlu0 %v967, 112
        %v981 = vpop.permute.xlu0 %980
        %982 = vrot.lane.b32.xlu0 %v968, 112
        %v983 = vpop.permute.xlu0 %982
        %984 = vrot.lane.b32.xlu0 %v969, 112
        %v985 = vpop.permute.xlu0 %984
        %986 = vrot.lane.b32.xlu0 %v970, 112
        %v987 = vpop.permute.xlu0 %986
        %988 = vrot.lane.b32.xlu0 %v971, 112
        %v989 = vpop.permute.xlu0 %988
        %v990 = vsel %vm397, %v979, %v981
        %v991 = vsel %vm397, %v981, %v983
        %v992 = vsel %vm397, %v985, %v987
        %v993 = vsel %vm397, %v987, %v989
        %998 = vst [vmem:[#allocation6 + $0x60] sm:$0xff] %v990
        %999 = vst [vmem:[#allocation6 + $0x68] sm:$0xff] %v991
        %1000 = vst [vmem:[#allocation6 + $0x70] sm:$0xff] %v992
        %1001 = vst [vmem:[#allocation6 + $0x78] sm:$0xff] %v993
        %v1002 = vld [vmem:[#allocation4] sm:$0xff]
        %v1003 = vld [vmem:[#allocation4 + $0x8] sm:$0xff]
        %v1004 = vld [vmem:[#allocation4 + $0x10] sm:$0xff]
        %v1005 = vld [vmem:[#allocation4 + $0x18] sm:$0xff]
        %v1006 = vld [vmem:[#allocation4 + $0x20] sm:$0xff]
        %v1007 = vld [vmem:[#allocation4 + $0x28] sm:$0xff]
        %1014 = vrot.lane.b32.xlu0 %v1002, 111
        %v1015 = vpop.permute.xlu0 %1014
        %1016 = vrot.lane.b32.xlu0 %v1003, 111
        %v1017 = vpop.permute.xlu0 %1016
        %1018 = vrot.lane.b32.xlu0 %v1004, 111
        %v1019 = vpop.permute.xlu0 %1018
        %1020 = vrot.lane.b32.xlu0 %v1005, 111
        %v1021 = vpop.permute.xlu0 %1020
        %1022 = vrot.lane.b32.xlu0 %v1006, 111
        %v1023 = vpop.permute.xlu0 %1022
        %1024 = vrot.lane.b32.xlu0 %v1007, 111
        %v1025 = vpop.permute.xlu0 %1024
        %v1026 = vsel %vm416, %v1015, %v1017
        %v1027 = vsel %vm416, %v1017, %v1019
        %v1028 = vsel %vm416, %v1021, %v1023
        %v1029 = vsel %vm416, %v1023, %v1025
        %1034 = vst [vmem:[#allocation6 + $0x80] sm:$0xff] %v1026
        %1035 = vst [vmem:[#allocation6 + $0x88] sm:$0xff] %v1027
        %1036 = vst [vmem:[#allocation6 + $0x90] sm:$0xff] %v1028
        %1037 = vst [vmem:[#allocation6 + $0x98] sm:$0xff] %v1029
        %v1038 = vld [vmem:[#allocation4] sm:$0xff]
        %v1039 = vld [vmem:[#allocation4 + $0x8] sm:$0xff]
        %v1040 = vld [vmem:[#allocation4 + $0x10] sm:$0xff]
        %v1041 = vld [vmem:[#allocation4 + $0x18] sm:$0xff]
        %v1042 = vld [vmem:[#allocation4 + $0x20] sm:$0xff]
        %v1043 = vld [vmem:[#allocation4 + $0x28] sm:$0xff]
        %1050 = vrot.lane.b32.xlu0 %v1038, 110
        %v1051 = vpop.permute.xlu0 %1050
        %1052 = vrot.lane.b32.xlu0 %v1039, 110
        %v1053 = vpop.permute.xlu0 %1052
        %1054 = vrot.lane.b32.xlu0 %v1040, 110
        %v1055 = vpop.permute.xlu0 %1054
        %1056 = vrot.lane.b32.xlu0 %v1041, 110
        %v1057 = vpop.permute.xlu0 %1056
        %1058 = vrot.lane.b32.xlu0 %v1042, 110
        %v1059 = vpop.permute.xlu0 %1058
        %1060 = vrot.lane.b32.xlu0 %v1043, 110
        %v1061 = vpop.permute.xlu0 %1060
        %v1062 = vsel %vm435, %v1051, %v1053
        %v1063 = vsel %vm435, %v1053, %v1055
        %v1064 = vsel %vm435, %v1057, %v1059
        %v1065 = vsel %vm435, %v1059, %v1061
        %1070 = vst [vmem:[#allocation6 + $0xa0] sm:$0xff] %v1062
        %1071 = vst [vmem:[#allocation6 + $0xa8] sm:$0xff] %v1063
        %1072 = vst [vmem:[#allocation6 + $0xb0] sm:$0xff] %v1064
        %1073 = vst [vmem:[#allocation6 + $0xb8] sm:$0xff] %v1065
        %v1074 = vld [vmem:[#allocation4] sm:$0xff]
        %v1075 = vld [vmem:[#allocation4 + $0x8] sm:$0xff]
        %v1076 = vld [vmem:[#allocation4 + $0x10] sm:$0xff]
        %v1077 = vld [vmem:[#allocation4 + $0x18] sm:$0xff]
        %v1078 = vld [vmem:[#allocation4 + $0x20] sm:$0xff]
        %v1079 = vld [vmem:[#allocation4 + $0x28] sm:$0xff]
        %1086 = vrot.lane.b32.xlu0 %v1074, 96
        %v1087 = vpop.permute.xlu0 %1086
        %1088 = vrot.lane.b32.xlu0 %v1075, 96
        %v1089 = vpop.permute.xlu0 %1088
        %1090 = vrot.lane.b32.xlu0 %v1076, 96
        %v1091 = vpop.permute.xlu0 %1090
        %1092 = vrot.lane.b32.xlu0 %v1077, 96
        %v1093 = vpop.permute.xlu0 %1092
        %1094 = vrot.lane.b32.xlu0 %v1078, 96
        %v1095 = vpop.permute.xlu0 %1094
        %1096 = vrot.lane.b32.xlu0 %v1079, 96
        %v1097 = vpop.permute.xlu0 %1096
        %v1098 = vsel %vm454, %v1087, %v1089
        %v1099 = vsel %vm454, %v1089, %v1091
        %v1100 = vsel %vm454, %v1093, %v1095
        %v1101 = vsel %vm454, %v1095, %v1097
        %1106 = vst [vmem:[#allocation6 + $0xc0] sm:$0xff] %v1098
        %1107 = vst [vmem:[#allocation6 + $0xc8] sm:$0xff] %v1099
        %1108 = vst [vmem:[#allocation6 + $0xd0] sm:$0xff] %v1100
        %1109 = vst [vmem:[#allocation6 + $0xd8] sm:$0xff] %v1101
        %v1110 = vld [vmem:[#allocation4] sm:$0xff]
        %v1111 = vld [vmem:[#allocation4 + $0x8] sm:$0xff]
        %v1112 = vld [vmem:[#allocation4 + $0x10] sm:$0xff]
        %v1113 = vld [vmem:[#allocation4 + $0x18] sm:$0xff]
        %v1114 = vld [vmem:[#allocation4 + $0x20] sm:$0xff]
        %v1115 = vld [vmem:[#allocation4 + $0x28] sm:$0xff]
        %1122 = vrot.lane.b32.xlu0 %v1110, 95
        %v1123 = vpop.permute.xlu0 %1122
        %1124 = vrot.lane.b32.xlu0 %v1111, 95
        %v1125 = vpop.permute.xlu0 %1124
        %1126 = vrot.lane.b32.xlu0 %v1112, 95
        %v1127 = vpop.permute.xlu0 %1126
        %1128 = vrot.lane.b32.xlu0 %v1113, 95
        %v1129 = vpop.permute.xlu0 %1128
        %1130 = vrot.lane.b32.xlu0 %v1114, 95
        %v1131 = vpop.permute.xlu0 %1130
        %1132 = vrot.lane.b32.xlu0 %v1115, 95
        %v1133 = vpop.permute.xlu0 %1132
        %v1134 = vsel %vm473, %v1123, %v1125
        %v1135 = vsel %vm473, %v1125, %v1127
        %v1136 = vsel %vm473, %v1129, %v1131
        %v1137 = vsel %vm473, %v1131, %v1133
        %1142 = vst [vmem:[#allocation6 + $0xe0] sm:$0xff] %v1134
        %1143 = vst [vmem:[#allocation6 + $0xe8] sm:$0xff] %v1135
        %1144 = vst [vmem:[#allocation6 + $0xf0] sm:$0xff] %v1136
        %1145 = vst [vmem:[#allocation6 + $0xf8] sm:$0xff] %v1137
        %v1146 = vld [vmem:[#allocation4] sm:$0xff]
        %v1147 = vld [vmem:[#allocation4 + $0x8] sm:$0xff]
        %v1148 = vld [vmem:[#allocation4 + $0x10] sm:$0xff]
        %v1149 = vld [vmem:[#allocation4 + $0x18] sm:$0xff]
        %v1150 = vld [vmem:[#allocation4 + $0x20] sm:$0xff]
        %v1151 = vld [vmem:[#allocation4 + $0x28] sm:$0xff]
        %1158 = vrot.lane.b32.xlu0 %v1146, 94
        %v1159 = vpop.permute.xlu0 %1158
        %1160 = vrot.lane.b32.xlu0 %v1147, 94
        %v1161 = vpop.permute.xlu0 %1160
        %1162 = vrot.lane.b32.xlu0 %v1148, 94
        %v1163 = vpop.permute.xlu0 %1162
        %1164 = vrot.lane.b32.xlu0 %v1149, 94
        %v1165 = vpop.permute.xlu0 %1164
        %1166 = vrot.lane.b32.xlu0 %v1150, 94
        %v1167 = vpop.permute.xlu0 %1166
        %1168 = vrot.lane.b32.xlu0 %v1151, 94
        %v1169 = vpop.permute.xlu0 %1168
        %v1170 = vsel %vm492, %v1159, %v1161
        %v1171 = vsel %vm492, %v1161, %v1163
        %v1172 = vsel %vm492, %v1165, %v1167
        %v1173 = vsel %vm492, %v1167, %v1169
        %1178 = vst [vmem:[#allocation6 + $0x100] sm:$0xff] %v1170
        %1179 = vst [vmem:[#allocation6 + $0x108] sm:$0xff] %v1171
        %1180 = vst [vmem:[#allocation6 + $0x110] sm:$0xff] %v1172
        %1181 = vst [vmem:[#allocation6 + $0x118] sm:$0xff] %v1173
        %v1182 = vld [vmem:[%s3] sm:$0xff]
        %v1183 = vld [vmem:[%s3 + $0x8] sm:$0xff]
        %v1184 = vld [vmem:[%s3 + $0x10] sm:$0xff]
        %v1185 = vld [vmem:[%s3 + $0x18] sm:$0xff]
        %v1186 = vld [vmem:[%s3 + $0x20] sm:$0xff]
        %v1187 = vld [vmem:[%s3 + $0x28] sm:$0xff]
        %v1188 = vld [vmem:[%s3 + $0x30] sm:$0xff]
        %v1189 = vld [vmem:[%s3 + $0x38] sm:$0xff]
        %v1190 = vld [vmem:[#allocation6] sm:$0xff]
        %v1191 = vld [vmem:[#allocation6 + $0x8] sm:$0xff]
        %v1192 = vld [vmem:[#allocation6 + $0x10] sm:$0xff]
        %v1193 = vld [vmem:[#allocation6 + $0x18] sm:$0xff]
        %v1194 = vld [vmem:[#allocation6 + $0x20] sm:$0xff]
        %v1195 = vld [vmem:[#allocation6 + $0x28] sm:$0xff]
        %v1196 = vld [vmem:[#allocation6 + $0x30] sm:$0xff]
        %v1197 = vld [vmem:[#allocation6 + $0x38] sm:$0xff]
        %v1198 = vld [vmem:[#allocation6 + $0x40] sm:$0xff]
        %v1199 = vld [vmem:[#allocation6 + $0x48] sm:$0xff]
        %v1200 = vld [vmem:[#allocation6 + $0x50] sm:$0xff]
        %v1201 = vld [vmem:[#allocation6 + $0x58] sm:$0xff]
        %v1202 = vld [vmem:[#allocation6 + $0x60] sm:$0xff]
        %v1203 = vld [vmem:[#allocation6 + $0x68] sm:$0xff]
        %v1204 = vld [vmem:[#allocation6 + $0x70] sm:$0xff]
        %v1205 = vld [vmem:[#allocation6 + $0x78] sm:$0xff]
        %v1206 = vld [vmem:[#allocation6 + $0x80] sm:$0xff]
        %v1207 = vld [vmem:[#allocation6 + $0x88] sm:$0xff]
        %v1208 = vld [vmem:[#allocation6 + $0x90] sm:$0xff]
        %v1209 = vld [vmem:[#allocation6 + $0x98] sm:$0xff]
        %v1210 = vld [vmem:[#allocation6 + $0xa0] sm:$0xff]
        %v1211 = vld [vmem:[#allocation6 + $0xa8] sm:$0xff]
        %v1212 = vld [vmem:[#allocation6 + $0xb0] sm:$0xff]
        %v1213 = vld [vmem:[#allocation6 + $0xb8] sm:$0xff]
        %v1214 = vld [vmem:[#allocation6 + $0xc0] sm:$0xff]
        %v1215 = vld [vmem:[#allocation6 + $0xc8] sm:$0xff]
        %v1216 = vld [vmem:[#allocation6 + $0xd0] sm:$0xff]
        %v1217 = vld [vmem:[#allocation6 + $0xd8] sm:$0xff]
        %v1218 = vld [vmem:[#allocation6 + $0xe0] sm:$0xff]
        %v1219 = vld [vmem:[#allocation6 + $0xe8] sm:$0xff]
        %v1220 = vld [vmem:[#allocation6 + $0xf0] sm:$0xff]
        %v1221 = vld [vmem:[#allocation6 + $0xf8] sm:$0xff]
        %v1222 = vld [vmem:[#allocation6 + $0x100] sm:$0xff]
        %v1223 = vld [vmem:[#allocation6 + $0x108] sm:$0xff]
        %v1224 = vld [vmem:[#allocation6 + $0x110] sm:$0xff]
        %v1225 = vld [vmem:[#allocation6 + $0x118] sm:$0xff]
        %v1226 = vld [vmem:[%s7] sm:$0xff]
        %v1227 = vld [vmem:[%s7 + $0x8] sm:$0xff]
        %v1228 = vld [vmem:[%s7 + $0x10] sm:$0xff]
        %v1229 = vld [vmem:[%s7 + $0x18] sm:$0xff]
        %1231 = vset.pattern.permute.xlu0 0
        %1232 = vperm.xlu0 %1231, %v1226
        %v1233 = vpop.permute.xlu0 %1232
        %1236 = vset.pattern.permute.xlu0 0
        %1237 = vperm.xlu0 %1236, %v1227
        %v1238 = vpop.permute.xlu0 %1237
        %1241 = vset.pattern.permute.xlu0 0
        %1242 = vperm.xlu0 %1241, %v1228
        %v1243 = vpop.permute.xlu0 %1242
        %1246 = vset.pattern.permute.xlu0 0
        %1247 = vperm.xlu0 %1246, %v1229
        %v1248 = vpop.permute.xlu0 %1247
        %vm1250 = vcmask 130048
        %v1252 = vsel %vm1250, %v1183, 0
        %v1255 = vsel %vm1250, %v1185, 0
        %v1258 = vsel %vm1250, %v1187, 0
        %v1261 = vsel %vm1250, %v1189, 0
        %1263 = vmatprep.subr.mxu0 %v1191
        %1264 = vmatpush1.msra.mxu0 %v1190
        %1265 = vmatprep.subr.mxu0 %v1193
        %1266 = vmatpush1.msra.mxu0 %v1192
        %1267 = vmatprep.subr.mxu0 %v1195
        %1268 = vmatpush1.msra.mxu0 %v1194
        %1269 = vmatprep.subr.mxu0 %v1197
        %1270 = vmatpush1.msra.mxu0 %v1196
        %1271 = vmatprep.subr.mxu0 %v1199
        %1272 = vmatpush1.msra.mxu0 %v1198
        %1273 = vmatprep.subr.mxu0 %v1201
        %1274 = vmatpush1.msra.mxu0 %v1200
        %1275 = vmatprep.subr.mxu0 %v1203
        %1276 = vmatpush1.msra.mxu0 %v1202
        %1277 = vmatprep.subr.mxu0 %v1205
        %1278 = vmatpush1.msra.mxu0 %v1204
        %1279 = vmatprep.subr.mxu0 %v1207
        %1280 = vmatpush1.msra.mxu0 %v1206
        %1281 = vmatprep.subr.mxu0 %v1209
        %1282 = vmatpush1.msra.mxu0 %v1208
        %1283 = vmatprep.subr.mxu0 %v1211
        %1284 = vmatpush1.msra.mxu0 %v1210
        %1285 = vmatprep.subr.mxu0 %v1213
        %1286 = vmatpush1.msra.mxu0 %v1212
        %1287 = vmatprep.subr.mxu0 %v1215
        %1288 = vmatpush1.msra.mxu0 %v1214
        %1289 = vmatprep.subr.mxu0 %v1217
        %1290 = vmatpush1.msra.mxu0 %v1216
        %1291 = vmatprep.subr.mxu0 %v1219
        %1292 = vmatpush1.msra.mxu0 %v1218
        %1293 = vmatprep.subr.mxu0 %v1221
        %1294 = vmatpush1.msra.mxu0 %v1220
        %1295 = vmatprep.subr.mxu0 %v1223
        %1296 = vmatpush1.msra.mxu0 %v1222
        %1297 = vmatprep.subr.mxu0 %v1225
        %1298 = vmatpush1.msra.mxu0 %v1224
        %1299 = vmatprep.subr.mxu0 0.0
        %1300 = vmatpush1.msra.mxu0 0.0
        %1301 = vmatprep.subr.mxu0 0.0
        %1302 = vmatpush1.msra.mxu0 0.0
        %1303 = vmatprep.subr.mxu0 0.0
        %1304 = vmatpush1.msra.mxu0 0.0
        %1305 = vmatprep.subr.mxu0 0.0
        %1306 = vmatpush1.msra.mxu0 0.0
        %1307 = vmatprep.subr.mxu0 0.0
        %1308 = vmatpush1.msra.mxu0 0.0
        %1309 = vmatprep.subr.mxu0 0.0
        %1310 = vmatpush1.msra.mxu0 0.0
        %1311 = vmatprep.subr.mxu0 0.0
        %1312 = vmatpush1.msra.mxu0 0.0
        %1313 = vmatprep.subr.mxu0 0.0
        %1314 = vmatpush1.msra.mxu0 0.0
        %1315 = vmatprep.subr.mxu0 0.0
        %1316 = vmatpush1.msra.mxu0 0.0
        %1317 = vmatprep.subr.mxu0 0.0
        %1318 = vmatpush1.msra.mxu0 0.0
        %1319 = vmatprep.subr.mxu0 0.0
        %1320 = vmatpush1.msra.mxu0 0.0
        %1321 = vmatprep.subr.mxu0 0.0
        %1322 = vmatpush1.msra.mxu0 0.0
        %1323 = vmatprep.subr.mxu0 0.0
        %1324 = vmatpush1.msra.mxu0 0.0
        %1325 = vmatprep.subr.mxu0 0.0
        %1326 = vmatpush1.msra.mxu0 0.0
        %1327 = vmatprep.mubr.f32.mxu0 %v1252
        %1328 = vmatmul.mubr.f32.gmra.mrb[0].mxu0 %v1182
        %v1329 = vpop.f32.mrb[0].mxu0
        %v1330 = vadd.f32 %v1233, %v1329
        %v1331 = vpop.f32.mrb[0].mxu0
        %v1332 = vadd.f32 %v1233, %v1331
        %1333 = vmatprep.mubr.f32.mxu0 %v1255
        %1334 = vmatmul.mubr.f32.gmra.mrb[0].mxu0 %v1184
        %v1335 = vpop.f32.mrb[0].mxu0
        %v1336 = vadd.f32 %v1238, %v1335
        %v1337 = vpop.f32.mrb[0].mxu0
        %v1338 = vadd.f32 %v1238, %v1337
        %1339 = vmatprep.mubr.f32.mxu0 %v1258
        %1340 = vmatmul.mubr.f32.gmra.mrb[0].mxu0 %v1186
        %v1341 = vpop.f32.mrb[0].mxu0
        %v1342 = vadd.f32 %v1243, %v1341
        %v1343 = vpop.f32.mrb[0].mxu0
        %v1344 = vadd.f32 %v1243, %v1343
        %1345 = vmatprep.mubr.f32.mxu0 %v1261
        %1346 = vmatmul.mubr.f32.gmra.mrb[0].mxu0 %v1188
        %v1347 = vpop.f32.mrb[0].mxu0
        %v1348 = vadd.f32 %v1248, %v1347
        %v1349 = vpop.f32.mrb[0].mxu0
        %v1350 = vadd.f32 %v1248, %v1349
        %1351 = vdwg.mxu0
        %vm1352 = vcmp.ge.f32.partialorder %v1330, 0.0
        %vm1353 = vcmp.ge.f32.partialorder %v1332, 0.0
        %vm1354 = vcmp.ge.f32.partialorder %v1336, 0.0
        %vm1355 = vcmp.ge.f32.partialorder %v1338, 0.0
        %vm1356 = vcmp.ge.f32.partialorder %v1342, 0.0
        %vm1357 = vcmp.ge.f32.partialorder %v1344, 0.0
        %vm1358 = vcmp.ge.f32.partialorder %v1348, 0.0
        %vm1359 = vcmp.ge.f32.partialorder %v1350, 0.0
        %v1360 = vmul.f32 %v1330, 0.2
        %v1361 = vmul.f32 %v1332, 0.2
        %v1362 = vmul.f32 %v1336, 0.2
        %v1363 = vmul.f32 %v1338, 0.2
        %v1364 = vmul.f32 %v1342, 0.2
        %v1365 = vmul.f32 %v1344, 0.2
        %v1366 = vmul.f32 %v1348, 0.2
        %v1367 = vmul.f32 %v1350, 0.2
        %v1368 = vsel %vm1352, %v1330, %v1360
        %v1369 = vsel %vm1353, %v1332, %v1361
        %v1370 = vsel %vm1354, %v1336, %v1362
        %v1371 = vsel %vm1355, %v1338, %v1363
        %v1372 = vsel %vm1356, %v1342, %v1364
        %v1373 = vsel %vm1357, %v1344, %v1365
        %v1374 = vsel %vm1358, %v1348, %v1366
        %v1375 = vsel %vm1359, %v1350, %v1367
        %1376 = vst [vmem:[#allocation5] sm:$0xff] %v1368
        %1377 = vst [vmem:[#allocation5 + $0x8] sm:$0xff] %v1369
        %1378 = vst [vmem:[#allocation5 + $0x18] sm:$0xff] %v1370
        %1379 = vst [vmem:[#allocation5 + $0x20] sm:$0xff] %v1371
        %1380 = vst [vmem:[#allocation5 + $0x30] sm:$0xff] %v1372
        %1381 = vst [vmem:[#allocation5 + $0x38] sm:$0xff] %v1373
        %1382 = vst [vmem:[#allocation5 + $0x48] sm:$0xff] %v1374
        %1383 = vst [vmem:[#allocation5 + $0x50] sm:$0xff] %v1375
        %v1384 = vld [vmem:[#allocation5] sm:$0xff]
        %v1385 = vld [vmem:[#allocation5 + $0x8] sm:$0xff]
        %v1386 = vld [vmem:[#allocation5 + $0x18] sm:$0xff]
        %v1387 = vld [vmem:[#allocation5 + $0x20] sm:$0xff]
        %v1388 = vld [vmem:[#allocation5 + $0x30] sm:$0xff]
        %v1389 = vld [vmem:[#allocation5 + $0x38] sm:$0xff]
        %v1390 = vld [vmem:[#allocation5 + $0x48] sm:$0xff]
        %v1391 = vld [vmem:[#allocation5 + $0x50] sm:$0xff]
        %1392 = vst [vmem:[#allocation6] sm:$0xff] %v1384
        %1393 = vst [vmem:[#allocation6 + $0x8] sm:$0xff] %v1385
        %1394 = vst [vmem:[#allocation6 + $0x10] sm:$0xff] %v1386
        %1395 = vst [vmem:[#allocation6 + $0x18] sm:$0xff] %v1387
        %1396 = vst [vmem:[#allocation6 + $0x20] sm:$0xff] %v1388
        %1397 = vst [vmem:[#allocation6 + $0x28] sm:$0xff] %v1389
        %1398 = vst [vmem:[#allocation6 + $0x30] sm:$0xff] %v1390
        %1399 = vst [vmem:[#allocation6 + $0x38] sm:$0xff] %v1391
        %v1400 = vld [vmem:[#allocation5] sm:$0xff]
        %v1401 = vld [vmem:[#allocation5 + $0x8] sm:$0xff]
        %v1402 = vld [vmem:[#allocation5 + $0x10] sm:$0xff]
        %v1403 = vld [vmem:[#allocation5 + $0x18] sm:$0xff]
        %v1404 = vld [vmem:[#allocation5 + $0x20] sm:$0xff]
        %v1405 = vld [vmem:[#allocation5 + $0x28] sm:$0xff]
        %v1406 = vld [vmem:[#allocation5 + $0x30] sm:$0xff]
        %v1407 = vld [vmem:[#allocation5 + $0x38] sm:$0xff]
        %v1408 = vld [vmem:[#allocation5 + $0x40] sm:$0xff]
        %v1409 = vld [vmem:[#allocation5 + $0x48] sm:$0xff]
        %v1410 = vld [vmem:[#allocation5 + $0x50] sm:$0xff]
        %v1411 = vld [vmem:[#allocation5 + $0x58] sm:$0xff]
        %1424 = vrot.lane.b32.xlu0 %v1400, 127
        %v1425 = vpop.permute.xlu0 %1424
        %1426 = vrot.lane.b32.xlu0 %v1401, 127
        %v1427 = vpop.permute.xlu0 %1426
        %1428 = vrot.lane.b32.xlu0 %v1402, 127
        %v1429 = vpop.permute.xlu0 %1428
        %1430 = vrot.lane.b32.xlu0 %v1403, 127
        %v1431 = vpop.permute.xlu0 %1430
        %1432 = vrot.lane.b32.xlu0 %v1404, 127
        %v1433 = vpop.permute.xlu0 %1432
        %1434 = vrot.lane.b32.xlu0 %v1405, 127
        %v1435 = vpop.permute.xlu0 %1434
        %1436 = vrot.lane.b32.xlu0 %v1406, 127
        %v1437 = vpop.permute.xlu0 %1436
        %1438 = vrot.lane.b32.xlu0 %v1407, 127
        %v1439 = vpop.permute.xlu0 %1438
        %1440 = vrot.lane.b32.xlu0 %v1408, 127
        %v1441 = vpop.permute.xlu0 %1440
        %1442 = vrot.lane.b32.xlu0 %v1409, 127
        %v1443 = vpop.permute.xlu0 %1442
        %1444 = vrot.lane.b32.xlu0 %v1410, 127
        %v1445 = vpop.permute.xlu0 %1444
        %1446 = vrot.lane.b32.xlu0 %v1411, 127
        %v1447 = vpop.permute.xlu0 %1446
        %v1448 = vsel %vm359, %v1425, %v1427
        %v1449 = vsel %vm359, %v1427, %v1429
        %v1450 = vsel %vm359, %v1431, %v1433
        %v1451 = vsel %vm359, %v1433, %v1435
        %v1452 = vsel %vm359, %v1437, %v1439
        %v1453 = vsel %vm359, %v1439, %v1441
        %v1454 = vsel %vm359, %v1443, %v1445
        %v1455 = vsel %vm359, %v1445, %v1447
        %1464 = vst [vmem:[#allocation6 + $0x40] sm:$0xff] %v1448
        %1465 = vst [vmem:[#allocation6 + $0x48] sm:$0xff] %v1449
        %1466 = vst [vmem:[#allocation6 + $0x50] sm:$0xff] %v1450
        %1467 = vst [vmem:[#allocation6 + $0x58] sm:$0xff] %v1451
        %1468 = vst [vmem:[#allocation6 + $0x60] sm:$0xff] %v1452
        %1469 = vst [vmem:[#allocation6 + $0x68] sm:$0xff] %v1453
        %1470 = vst [vmem:[#allocation6 + $0x70] sm:$0xff] %v1454
        %1471 = vst [vmem:[#allocation6 + $0x78] sm:$0xff] %v1455
        %v1472 = vld [vmem:[#allocation5] sm:$0xff]
        %v1473 = vld [vmem:[#allocation5 + $0x8] sm:$0xff]
        %v1474 = vld [vmem:[#allocation5 + $0x10] sm:$0xff]
        %v1475 = vld [vmem:[#allocation5 + $0x18] sm:$0xff]
        %v1476 = vld [vmem:[#allocation5 + $0x20] sm:$0xff]
        %v1477 = vld [vmem:[#allocation5 + $0x28] sm:$0xff]
        %v1478 = vld [vmem:[#allocation5 + $0x30] sm:$0xff]
        %v1479 = vld [vmem:[#allocation5 + $0x38] sm:$0xff]
        %v1480 = vld [vmem:[#allocation5 + $0x40] sm:$0xff]
        %v1481 = vld [vmem:[#allocation5 + $0x48] sm:$0xff]
        %v1482 = vld [vmem:[#allocation5 + $0x50] sm:$0xff]
        %v1483 = vld [vmem:[#allocation5 + $0x58] sm:$0xff]
        %1496 = vrot.lane.b32.xlu0 %v1472, 126
        %v1497 = vpop.permute.xlu0 %1496
        %1498 = vrot.lane.b32.xlu0 %v1473, 126
        %v1499 = vpop.permute.xlu0 %1498
        %1500 = vrot.lane.b32.xlu0 %v1474, 126
        %v1501 = vpop.permute.xlu0 %1500
        %1502 = vrot.lane.b32.xlu0 %v1475, 126
        %v1503 = vpop.permute.xlu0 %1502
        %1504 = vrot.lane.b32.xlu0 %v1476, 126
        %v1505 = vpop.permute.xlu0 %1504
        %1506 = vrot.lane.b32.xlu0 %v1477, 126
        %v1507 = vpop.permute.xlu0 %1506
        %1508 = vrot.lane.b32.xlu0 %v1478, 126
        %v1509 = vpop.permute.xlu0 %1508
        %1510 = vrot.lane.b32.xlu0 %v1479, 126
        %v1511 = vpop.permute.xlu0 %1510
        %1512 = vrot.lane.b32.xlu0 %v1480, 126
        %v1513 = vpop.permute.xlu0 %1512
        %1514 = vrot.lane.b32.xlu0 %v1481, 126
        %v1515 = vpop.permute.xlu0 %1514
        %1516 = vrot.lane.b32.xlu0 %v1482, 126
        %v1517 = vpop.permute.xlu0 %1516
        %1518 = vrot.lane.b32.xlu0 %v1483, 126
        %v1519 = vpop.permute.xlu0 %1518
        %v1520 = vsel %vm378, %v1497, %v1499
        %v1521 = vsel %vm378, %v1499, %v1501
        %v1522 = vsel %vm378, %v1503, %v1505
        %v1523 = vsel %vm378, %v1505, %v1507
        %v1524 = vsel %vm378, %v1509, %v1511
        %v1525 = vsel %vm378, %v1511, %v1513
        %v1526 = vsel %vm378, %v1515, %v1517
        %v1527 = vsel %vm378, %v1517, %v1519
        %1536 = vst [vmem:[#allocation6 + $0x80] sm:$0xff] %v1520
        %1537 = vst [vmem:[#allocation6 + $0x88] sm:$0xff] %v1521
        %1538 = vst [vmem:[#allocation6 + $0x90] sm:$0xff] %v1522
        %1539 = vst [vmem:[#allocation6 + $0x98] sm:$0xff] %v1523
        %1540 = vst [vmem:[#allocation6 + $0xa0] sm:$0xff] %v1524
        %1541 = vst [vmem:[#allocation6 + $0xa8] sm:$0xff] %v1525
        %1542 = vst [vmem:[#allocation6 + $0xb0] sm:$0xff] %v1526
        %1543 = vst [vmem:[#allocation6 + $0xb8] sm:$0xff] %v1527
        %v1544 = vld [vmem:[#allocation5] sm:$0xff]
        %v1545 = vld [vmem:[#allocation5 + $0x8] sm:$0xff]
        %v1546 = vld [vmem:[#allocation5 + $0x10] sm:$0xff]
        %v1547 = vld [vmem:[#allocation5 + $0x18] sm:$0xff]
        %v1548 = vld [vmem:[#allocation5 + $0x20] sm:$0xff]
        %v1549 = vld [vmem:[#allocation5 + $0x28] sm:$0xff]
        %v1550 = vld [vmem:[#allocation5 + $0x30] sm:$0xff]
        %v1551 = vld [vmem:[#allocation5 + $0x38] sm:$0xff]
        %v1552 = vld [vmem:[#allocation5 + $0x40] sm:$0xff]
        %v1553 = vld [vmem:[#allocation5 + $0x48] sm:$0xff]
        %v1554 = vld [vmem:[#allocation5 + $0x50] sm:$0xff]
        %v1555 = vld [vmem:[#allocation5 + $0x58] sm:$0xff]
        %1568 = vrot.lane.b32.xlu0 %v1544, 112
        %v1569 = vpop.permute.xlu0 %1568
        %1570 = vrot.lane.b32.xlu0 %v1545, 112
        %v1571 = vpop.permute.xlu0 %1570
        %1572 = vrot.lane.b32.xlu0 %v1546, 112
        %v1573 = vpop.permute.xlu0 %1572
        %1574 = vrot.lane.b32.xlu0 %v1547, 112
        %v1575 = vpop.permute.xlu0 %1574
        %1576 = vrot.lane.b32.xlu0 %v1548, 112
        %v1577 = vpop.permute.xlu0 %1576
        %1578 = vrot.lane.b32.xlu0 %v1549, 112
        %v1579 = vpop.permute.xlu0 %1578
        %1580 = vrot.lane.b32.xlu0 %v1550, 112
        %v1581 = vpop.permute.xlu0 %1580
        %1582 = vrot.lane.b32.xlu0 %v1551, 112
        %v1583 = vpop.permute.xlu0 %1582
        %1584 = vrot.lane.b32.xlu0 %v1552, 112
        %v1585 = vpop.permute.xlu0 %1584
        %1586 = vrot.lane.b32.xlu0 %v1553, 112
        %v1587 = vpop.permute.xlu0 %1586
        %1588 = vrot.lane.b32.xlu0 %v1554, 112
        %v1589 = vpop.permute.xlu0 %1588
        %1590 = vrot.lane.b32.xlu0 %v1555, 112
        %v1591 = vpop.permute.xlu0 %1590
        %v1592 = vsel %vm397, %v1569, %v1571
        %v1593 = vsel %vm397, %v1571, %v1573
        %v1594 = vsel %vm397, %v1575, %v1577
        %v1595 = vsel %vm397, %v1577, %v1579
        %v1596 = vsel %vm397, %v1581, %v1583
        %v1597 = vsel %vm397, %v1583, %v1585
        %v1598 = vsel %vm397, %v1587, %v1589
        %v1599 = vsel %vm397, %v1589, %v1591
        %1608 = vst [vmem:[#allocation6 + $0xc0] sm:$0xff] %v1592
        %1609 = vst [vmem:[#allocation6 + $0xc8] sm:$0xff] %v1593
        %1610 = vst [vmem:[#allocation6 + $0xd0] sm:$0xff] %v1594
        %1611 = vst [vmem:[#allocation6 + $0xd8] sm:$0xff] %v1595
        %1612 = vst [vmem:[#allocation6 + $0xe0] sm:$0xff] %v1596
        %1613 = vst [vmem:[#allocation6 + $0xe8] sm:$0xff] %v1597
        %1614 = vst [vmem:[#allocation6 + $0xf0] sm:$0xff] %v1598
        %1615 = vst [vmem:[#allocation6 + $0xf8] sm:$0xff] %v1599
        %v1616 = vld [vmem:[#allocation5] sm:$0xff]
        %v1617 = vld [vmem:[#allocation5 + $0x8] sm:$0xff]
        %v1618 = vld [vmem:[#allocation5 + $0x10] sm:$0xff]
        %v1619 = vld [vmem:[#allocation5 + $0x18] sm:$0xff]
        %v1620 = vld [vmem:[#allocation5 + $0x20] sm:$0xff]
        %v1621 = vld [vmem:[#allocation5 + $0x28] sm:$0xff]
        %v1622 = vld [vmem:[#allocation5 + $0x30] sm:$0xff]
        %v1623 = vld [vmem:[#allocation5 + $0x38] sm:$0xff]
        %v1624 = vld [vmem:[#allocation5 + $0x40] sm:$0xff]
        %v1625 = vld [vmem:[#allocation5 + $0x48] sm:$0xff]
        %v1626 = vld [vmem:[#allocation5 + $0x50] sm:$0xff]
        %v1627 = vld [vmem:[#allocation5 + $0x58] sm:$0xff]
        %1640 = vrot.lane.b32.xlu0 %v1616, 111
        %v1641 = vpop.permute.xlu0 %1640
        %1642 = vrot.lane.b32.xlu0 %v1617, 111
        %v1643 = vpop.permute.xlu0 %1642
        %1644 = vrot.lane.b32.xlu0 %v1618, 111
        %v1645 = vpop.permute.xlu0 %1644
        %1646 = vrot.lane.b32.xlu0 %v1619, 111
        %v1647 = vpop.permute.xlu0 %1646
        %1648 = vrot.lane.b32.xlu0 %v1620, 111
        %v1649 = vpop.permute.xlu0 %1648
        %1650 = vrot.lane.b32.xlu0 %v1621, 111
        %v1651 = vpop.permute.xlu0 %1650
        %1652 = vrot.lane.b32.xlu0 %v1622, 111
        %v1653 = vpop.permute.xlu0 %1652
        %1654 = vrot.lane.b32.xlu0 %v1623, 111
        %v1655 = vpop.permute.xlu0 %1654
        %1656 = vrot.lane.b32.xlu0 %v1624, 111
        %v1657 = vpop.permute.xlu0 %1656
        %1658 = vrot.lane.b32.xlu0 %v1625, 111
        %v1659 = vpop.permute.xlu0 %1658
        %1660 = vrot.lane.b32.xlu0 %v1626, 111
        %v1661 = vpop.permute.xlu0 %1660
        %1662 = vrot.lane.b32.xlu0 %v1627, 111
        %v1663 = vpop.permute.xlu0 %1662
        %v1664 = vsel %vm416, %v1641, %v1643
        %v1665 = vsel %vm416, %v1643, %v1645
        %v1666 = vsel %vm416, %v1647, %v1649
        %v1667 = vsel %vm416, %v1649, %v1651
        %v1668 = vsel %vm416, %v1653, %v1655
        %v1669 = vsel %vm416, %v1655, %v1657
        %v1670 = vsel %vm416, %v1659, %v1661
        %v1671 = vsel %vm416, %v1661, %v1663
        %1680 = vst [vmem:[#allocation6 + $0x100] sm:$0xff] %v1664
        %1681 = vst [vmem:[#allocation6 + $0x108] sm:$0xff] %v1665
        %1682 = vst [vmem:[#allocation6 + $0x110] sm:$0xff] %v1666
        %1683 = vst [vmem:[#allocation6 + $0x118] sm:$0xff] %v1667
        %1684 = vst [vmem:[#allocation6 + $0x120] sm:$0xff] %v1668
        %1685 = vst [vmem:[#allocation6 + $0x128] sm:$0xff] %v1669
        %1686 = vst [vmem:[#allocation6 + $0x130] sm:$0xff] %v1670
        %1687 = vst [vmem:[#allocation6 + $0x138] sm:$0xff] %v1671
        %v1688 = vld [vmem:[#allocation5] sm:$0xff]
        %v1689 = vld [vmem:[#allocation5 + $0x8] sm:$0xff]
        %v1690 = vld [vmem:[#allocation5 + $0x10] sm:$0xff]
        %v1691 = vld [vmem:[#allocation5 + $0x18] sm:$0xff]
        %v1692 = vld [vmem:[#allocation5 + $0x20] sm:$0xff]
        %v1693 = vld [vmem:[#allocation5 + $0x28] sm:$0xff]
        %v1694 = vld [vmem:[#allocation5 + $0x30] sm:$0xff]
        %v1695 = vld [vmem:[#allocation5 + $0x38] sm:$0xff]
        %v1696 = vld [vmem:[#allocation5 + $0x40] sm:$0xff]
        %v1697 = vld [vmem:[#allocation5 + $0x48] sm:$0xff]
        %v1698 = vld [vmem:[#allocation5 + $0x50] sm:$0xff]
        %v1699 = vld [vmem:[#allocation5 + $0x58] sm:$0xff]
        %1712 = vrot.lane.b32.xlu0 %v1688, 110
        %v1713 = vpop.permute.xlu0 %1712
        %1714 = vrot.lane.b32.xlu0 %v1689, 110
        %v1715 = vpop.permute.xlu0 %1714
        %1716 = vrot.lane.b32.xlu0 %v1690, 110
        %v1717 = vpop.permute.xlu0 %1716
        %1718 = vrot.lane.b32.xlu0 %v1691, 110
        %v1719 = vpop.permute.xlu0 %1718
        %1720 = vrot.lane.b32.xlu0 %v1692, 110
        %v1721 = vpop.permute.xlu0 %1720
        %1722 = vrot.lane.b32.xlu0 %v1693, 110
        %v1723 = vpop.permute.xlu0 %1722
        %1724 = vrot.lane.b32.xlu0 %v1694, 110
        %v1725 = vpop.permute.xlu0 %1724
        %1726 = vrot.lane.b32.xlu0 %v1695, 110
        %v1727 = vpop.permute.xlu0 %1726
        %1728 = vrot.lane.b32.xlu0 %v1696, 110
        %v1729 = vpop.permute.xlu0 %1728
        %1730 = vrot.lane.b32.xlu0 %v1697, 110
        %v1731 = vpop.permute.xlu0 %1730
        %1732 = vrot.lane.b32.xlu0 %v1698, 110
        %v1733 = vpop.permute.xlu0 %1732
        %1734 = vrot.lane.b32.xlu0 %v1699, 110
        %v1735 = vpop.permute.xlu0 %1734
        %v1736 = vsel %vm435, %v1713, %v1715
        %v1737 = vsel %vm435, %v1715, %v1717
        %v1738 = vsel %vm435, %v1719, %v1721
        %v1739 = vsel %vm435, %v1721, %v1723
        %v1740 = vsel %vm435, %v1725, %v1727
        %v1741 = vsel %vm435, %v1727, %v1729
        %v1742 = vsel %vm435, %v1731, %v1733
        %v1743 = vsel %vm435, %v1733, %v1735
        %1752 = vst [vmem:[#allocation6 + $0x140] sm:$0xff] %v1736
        %1753 = vst [vmem:[#allocation6 + $0x148] sm:$0xff] %v1737
        %1754 = vst [vmem:[#allocation6 + $0x150] sm:$0xff] %v1738
        %1755 = vst [vmem:[#allocation6 + $0x158] sm:$0xff] %v1739
        %1756 = vst [vmem:[#allocation6 + $0x160] sm:$0xff] %v1740
        %1757 = vst [vmem:[#allocation6 + $0x168] sm:$0xff] %v1741
        %1758 = vst [vmem:[#allocation6 + $0x170] sm:$0xff] %v1742
        %1759 = vst [vmem:[#allocation6 + $0x178] sm:$0xff] %v1743
        %v1760 = vld [vmem:[#allocation5] sm:$0xff]
        %v1761 = vld [vmem:[#allocation5 + $0x8] sm:$0xff]
        %v1762 = vld [vmem:[#allocation5 + $0x10] sm:$0xff]
        %v1763 = vld [vmem:[#allocation5 + $0x18] sm:$0xff]
        %v1764 = vld [vmem:[#allocation5 + $0x20] sm:$0xff]
        %v1765 = vld [vmem:[#allocation5 + $0x28] sm:$0xff]
        %v1766 = vld [vmem:[#allocation5 + $0x30] sm:$0xff]
        %v1767 = vld [vmem:[#allocation5 + $0x38] sm:$0xff]
        %v1768 = vld [vmem:[#allocation5 + $0x40] sm:$0xff]
        %v1769 = vld [vmem:[#allocation5 + $0x48] sm:$0xff]
        %v1770 = vld [vmem:[#allocation5 + $0x50] sm:$0xff]
        %v1771 = vld [vmem:[#allocation5 + $0x58] sm:$0xff]
        %1784 = vrot.lane.b32.xlu0 %v1760, 96
        %v1785 = vpop.permute.xlu0 %1784
        %1786 = vrot.lane.b32.xlu0 %v1761, 96
        %v1787 = vpop.permute.xlu0 %1786
        %1788 = vrot.lane.b32.xlu0 %v1762, 96
        %v1789 = vpop.permute.xlu0 %1788
        %1790 = vrot.lane.b32.xlu0 %v1763, 96
        %v1791 = vpop.permute.xlu0 %1790
        %1792 = vrot.lane.b32.xlu0 %v1764, 96
        %v1793 = vpop.permute.xlu0 %1792
        %1794 = vrot.lane.b32.xlu0 %v1765, 96
        %v1795 = vpop.permute.xlu0 %1794
        %1796 = vrot.lane.b32.xlu0 %v1766, 96
        %v1797 = vpop.permute.xlu0 %1796
        %1798 = vrot.lane.b32.xlu0 %v1767, 96
        %v1799 = vpop.permute.xlu0 %1798
        %1800 = vrot.lane.b32.xlu0 %v1768, 96
        %v1801 = vpop.permute.xlu0 %1800
        %1802 = vrot.lane.b32.xlu0 %v1769, 96
        %v1803 = vpop.permute.xlu0 %1802
        %1804 = vrot.lane.b32.xlu0 %v1770, 96
        %v1805 = vpop.permute.xlu0 %1804
        %1806 = vrot.lane.b32.xlu0 %v1771, 96
        %v1807 = vpop.permute.xlu0 %1806
        %v1808 = vsel %vm454, %v1785, %v1787
        %v1809 = vsel %vm454, %v1787, %v1789
        %v1810 = vsel %vm454, %v1791, %v1793
        %v1811 = vsel %vm454, %v1793, %v1795
        %v1812 = vsel %vm454, %v1797, %v1799
        %v1813 = vsel %vm454, %v1799, %v1801
        %v1814 = vsel %vm454, %v1803, %v1805
        %v1815 = vsel %vm454, %v1805, %v1807
        %1824 = vst [vmem:[#allocation6 + $0x180] sm:$0xff] %v1808
        %1825 = vst [vmem:[#allocation6 + $0x188] sm:$0xff] %v1809
        %1826 = vst [vmem:[#allocation6 + $0x190] sm:$0xff] %v1810
        %1827 = vst [vmem:[#allocation6 + $0x198] sm:$0xff] %v1811
        %1828 = vst [vmem:[#allocation6 + $0x1a0] sm:$0xff] %v1812
        %1829 = vst [vmem:[#allocation6 + $0x1a8] sm:$0xff] %v1813
        %1830 = vst [vmem:[#allocation6 + $0x1b0] sm:$0xff] %v1814
        %1831 = vst [vmem:[#allocation6 + $0x1b8] sm:$0xff] %v1815
        %v1832 = vld [vmem:[#allocation5] sm:$0xff]
        %v1833 = vld [vmem:[#allocation5 + $0x8] sm:$0xff]
        %v1834 = vld [vmem:[#allocation5 + $0x10] sm:$0xff]
        %v1835 = vld [vmem:[#allocation5 + $0x18] sm:$0xff]
        %v1836 = vld [vmem:[#allocation5 + $0x20] sm:$0xff]
        %v1837 = vld [vmem:[#allocation5 + $0x28] sm:$0xff]
        %v1838 = vld [vmem:[#allocation5 + $0x30] sm:$0xff]
        %v1839 = vld [vmem:[#allocation5 + $0x38] sm:$0xff]
        %v1840 = vld [vmem:[#allocation5 + $0x40] sm:$0xff]
        %v1841 = vld [vmem:[#allocation5 + $0x48] sm:$0xff]
        %v1842 = vld [vmem:[#allocation5 + $0x50] sm:$0xff]
        %v1843 = vld [vmem:[#allocation5 + $0x58] sm:$0xff]
        %1856 = vrot.lane.b32.xlu0 %v1832, 95
        %v1857 = vpop.permute.xlu0 %1856
        %1858 = vrot.lane.b32.xlu0 %v1833, 95
        %v1859 = vpop.permute.xlu0 %1858
        %1860 = vrot.lane.b32.xlu0 %v1834, 95
        %v1861 = vpop.permute.xlu0 %1860
        %1862 = vrot.lane.b32.xlu0 %v1835, 95
        %v1863 = vpop.permute.xlu0 %1862
        %1864 = vrot.lane.b32.xlu0 %v1836, 95
        %v1865 = vpop.permute.xlu0 %1864
        %1866 = vrot.lane.b32.xlu0 %v1837, 95
        %v1867 = vpop.permute.xlu0 %1866
        %1868 = vrot.lane.b32.xlu0 %v1838, 95
        %v1869 = vpop.permute.xlu0 %1868
        %1870 = vrot.lane.b32.xlu0 %v1839, 95
        %v1871 = vpop.permute.xlu0 %1870
        %1872 = vrot.lane.b32.xlu0 %v1840, 95
        %v1873 = vpop.permute.xlu0 %1872
        %1874 = vrot.lane.b32.xlu0 %v1841, 95
        %v1875 = vpop.permute.xlu0 %1874
        %1876 = vrot.lane.b32.xlu0 %v1842, 95
        %v1877 = vpop.permute.xlu0 %1876
        %1878 = vrot.lane.b32.xlu0 %v1843, 95
        %v1879 = vpop.permute.xlu0 %1878
        %v1880 = vsel %vm473, %v1857, %v1859
        %v1881 = vsel %vm473, %v1859, %v1861
        %v1882 = vsel %vm473, %v1863, %v1865
        %v1883 = vsel %vm473, %v1865, %v1867
        %v1884 = vsel %vm473, %v1869, %v1871
        %v1885 = vsel %vm473, %v1871, %v1873
        %v1886 = vsel %vm473, %v1875, %v1877
        %v1887 = vsel %vm473, %v1877, %v1879
        %1896 = vst [vmem:[#allocation6 + $0x1c0] sm:$0xff] %v1880
        %1897 = vst [vmem:[#allocation6 + $0x1c8] sm:$0xff] %v1881
        %1898 = vst [vmem:[#allocation6 + $0x1d0] sm:$0xff] %v1882
        %1899 = vst [vmem:[#allocation6 + $0x1d8] sm:$0xff] %v1883
        %1900 = vst [vmem:[#allocation6 + $0x1e0] sm:$0xff] %v1884
        %1901 = vst [vmem:[#allocation6 + $0x1e8] sm:$0xff] %v1885
        %1902 = vst [vmem:[#allocation6 + $0x1f0] sm:$0xff] %v1886
        %1903 = vst [vmem:[#allocation6 + $0x1f8] sm:$0xff] %v1887
        %v1904 = vld [vmem:[#allocation5] sm:$0xff]
        %v1905 = vld [vmem:[#allocation5 + $0x8] sm:$0xff]
        %v1906 = vld [vmem:[#allocation5 + $0x10] sm:$0xff]
        %v1907 = vld [vmem:[#allocation5 + $0x18] sm:$0xff]
        %v1908 = vld [vmem:[#allocation5 + $0x20] sm:$0xff]
        %v1909 = vld [vmem:[#allocation5 + $0x28] sm:$0xff]
        %v1910 = vld [vmem:[#allocation5 + $0x30] sm:$0xff]
        %v1911 = vld [vmem:[#allocation5 + $0x38] sm:$0xff]
        %v1912 = vld [vmem:[#allocation5 + $0x40] sm:$0xff]
        %v1913 = vld [vmem:[#allocation5 + $0x48] sm:$0xff]
        %v1914 = vld [vmem:[#allocation5 + $0x50] sm:$0xff]
        %v1915 = vld [vmem:[#allocation5 + $0x58] sm:$0xff]
        %1928 = vrot.lane.b32.xlu0 %v1904, 94
        %v1929 = vpop.permute.xlu0 %1928
        %1930 = vrot.lane.b32.xlu0 %v1905, 94
        %v1931 = vpop.permute.xlu0 %1930
        %1932 = vrot.lane.b32.xlu0 %v1906, 94
        %v1933 = vpop.permute.xlu0 %1932
        %1934 = vrot.lane.b32.xlu0 %v1907, 94
        %v1935 = vpop.permute.xlu0 %1934
        %1936 = vrot.lane.b32.xlu0 %v1908, 94
        %v1937 = vpop.permute.xlu0 %1936
        %1938 = vrot.lane.b32.xlu0 %v1909, 94
        %v1939 = vpop.permute.xlu0 %1938
        %1940 = vrot.lane.b32.xlu0 %v1910, 94
        %v1941 = vpop.permute.xlu0 %1940
        %1942 = vrot.lane.b32.xlu0 %v1911, 94
        %v1943 = vpop.permute.xlu0 %1942
        %1944 = vrot.lane.b32.xlu0 %v1912, 94
        %v1945 = vpop.permute.xlu0 %1944
        %1946 = vrot.lane.b32.xlu0 %v1913, 94
        %v1947 = vpop.permute.xlu0 %1946
        %1948 = vrot.lane.b32.xlu0 %v1914, 94
        %v1949 = vpop.permute.xlu0 %1948
        %1950 = vrot.lane.b32.xlu0 %v1915, 94
        %v1951 = vpop.permute.xlu0 %1950
        %v1952 = vsel %vm492, %v1929, %v1931
        %v1953 = vsel %vm492, %v1931, %v1933
        %v1954 = vsel %vm492, %v1935, %v1937
        %v1955 = vsel %vm492, %v1937, %v1939
        %v1956 = vsel %vm492, %v1941, %v1943
        %v1957 = vsel %vm492, %v1943, %v1945
        %v1958 = vsel %vm492, %v1947, %v1949
        %v1959 = vsel %vm492, %v1949, %v1951
        %1968 = vst [vmem:[#allocation6 + $0x200] sm:$0xff] %v1952
        %1969 = vst [vmem:[#allocation6 + $0x208] sm:$0xff] %v1953
        %1970 = vst [vmem:[#allocation6 + $0x210] sm:$0xff] %v1954
        %1971 = vst [vmem:[#allocation6 + $0x218] sm:$0xff] %v1955
        %1972 = vst [vmem:[#allocation6 + $0x220] sm:$0xff] %v1956
        %1973 = vst [vmem:[#allocation6 + $0x228] sm:$0xff] %v1957
        %1974 = vst [vmem:[#allocation6 + $0x230] sm:$0xff] %v1958
        %1975 = vst [vmem:[#allocation6 + $0x238] sm:$0xff] %v1959
        %v1976 = vld [vmem:[%s4] sm:$0xff]
        %v1977 = vld [vmem:[%s4 + $0x8] sm:$0xff]
        %v1978 = vld [vmem:[%s4 + $0x10] sm:$0xff]
        %v1979 = vld [vmem:[%s4 + $0x18] sm:$0xff]
        %v1980 = vld [vmem:[%s4 + $0x20] sm:$0xff]
        %v1981 = vld [vmem:[%s4 + $0x28] sm:$0xff]
        %v1982 = vld [vmem:[%s4 + $0x30] sm:$0xff]
        %v1983 = vld [vmem:[%s4 + $0x38] sm:$0xff]
        %v1984 = vld [vmem:[%s4 + $0x40] sm:$0xff]
        %v1985 = vld [vmem:[%s4 + $0x48] sm:$0xff]
        %v1986 = vld [vmem:[%s4 + $0x50] sm:$0xff]
        %v1987 = vld [vmem:[%s4 + $0x58] sm:$0xff]
        %v1988 = vld [vmem:[%s4 + $0x60] sm:$0xff]
        %v1989 = vld [vmem:[%s4 + $0x68] sm:$0xff]
        %v1990 = vld [vmem:[%s4 + $0x70] sm:$0xff]
        %v1991 = vld [vmem:[%s4 + $0x78] sm:$0xff]
        %v1992 = vld [vmem:[%s4 + $0x80] sm:$0xff]
        %v1993 = vld [vmem:[%s4 + $0x88] sm:$0xff]
        %v1994 = vld [vmem:[%s4 + $0x90] sm:$0xff]
        %v1995 = vld [vmem:[%s4 + $0x98] sm:$0xff]
        %v1996 = vld [vmem:[%s4 + $0xa0] sm:$0xff]
        %v1997 = vld [vmem:[%s4 + $0xa8] sm:$0xff]
        %v1998 = vld [vmem:[%s4 + $0xb0] sm:$0xff]
        %v1999 = vld [vmem:[%s4 + $0xb8] sm:$0xff]
        %v2000 = vld [vmem:[#allocation6] sm:$0xff]
        %v2001 = vld [vmem:[#allocation6 + $0x8] sm:$0xff]
        %v2002 = vld [vmem:[#allocation6 + $0x10] sm:$0xff]
        %v2003 = vld [vmem:[#allocation6 + $0x18] sm:$0xff]
        %v2004 = vld [vmem:[#allocation6 + $0x20] sm:$0xff]
        %v2005 = vld [vmem:[#allocation6 + $0x28] sm:$0xff]
        %v2006 = vld [vmem:[#allocation6 + $0x30] sm:$0xff]
        %v2007 = vld [vmem:[#allocation6 + $0x38] sm:$0xff]
        %v2008 = vld [vmem:[#allocation6 + $0x40] sm:$0xff]
        %v2009 = vld [vmem:[#allocation6 + $0x48] sm:$0xff]
        %v2010 = vld [vmem:[#allocation6 + $0x50] sm:$0xff]
        %v2011 = vld [vmem:[#allocation6 + $0x58] sm:$0xff]
        %v2012 = vld [vmem:[#allocation6 + $0x60] sm:$0xff]
        %v2013 = vld [vmem:[#allocation6 + $0x68] sm:$0xff]
        %v2014 = vld [vmem:[#allocation6 + $0x70] sm:$0xff]
        %v2015 = vld [vmem:[#allocation6 + $0x78] sm:$0xff]
        %v2016 = vld [vmem:[#allocation6 + $0x80] sm:$0xff]
        %v2017 = vld [vmem:[#allocation6 + $0x88] sm:$0xff]
        %v2018 = vld [vmem:[#allocation6 + $0x90] sm:$0xff]
        %v2019 = vld [vmem:[#allocation6 + $0x98] sm:$0xff]
        %v2020 = vld [vmem:[#allocation6 + $0xa0] sm:$0xff]
        %v2021 = vld [vmem:[#allocation6 + $0xa8] sm:$0xff]
        %v2022 = vld [vmem:[#allocation6 + $0xb0] sm:$0xff]
        %v2023 = vld [vmem:[#allocation6 + $0xb8] sm:$0xff]
        %v2024 = vld [vmem:[#allocation6 + $0xc0] sm:$0xff]
        %v2025 = vld [vmem:[#allocation6 + $0xc8] sm:$0xff]
        %v2026 = vld [vmem:[#allocation6 + $0xd0] sm:$0xff]
        %v2027 = vld [vmem:[#allocation6 + $0xd8] sm:$0xff]
        %v2028 = vld [vmem:[#allocation6 + $0xe0] sm:$0xff]
        %v2029 = vld [vmem:[#allocation6 + $0xe8] sm:$0xff]
        %v2030 = vld [vmem:[#allocation6 + $0xf0] sm:$0xff]
        %v2031 = vld [vmem:[#allocation6 + $0xf8] sm:$0xff]
        %v2032 = vld [vmem:[#allocation6 + $0x100] sm:$0xff]
        %v2033 = vld [vmem:[#allocation6 + $0x108] sm:$0xff]
        %v2034 = vld [vmem:[#allocation6 + $0x110] sm:$0xff]
        %v2035 = vld [vmem:[#allocation6 + $0x118] sm:$0xff]
        %v2036 = vld [vmem:[#allocation6 + $0x120] sm:$0xff]
        %v2037 = vld [vmem:[#allocation6 + $0x128] sm:$0xff]
        %v2038 = vld [vmem:[#allocation6 + $0x130] sm:$0xff]
        %v2039 = vld [vmem:[#allocation6 + $0x138] sm:$0xff]
        %v2040 = vld [vmem:[#allocation6 + $0x140] sm:$0xff]
        %v2041 = vld [vmem:[#allocation6 + $0x148] sm:$0xff]
        %v2042 = vld [vmem:[#allocation6 + $0x150] sm:$0xff]
        %v2043 = vld [vmem:[#allocation6 + $0x158] sm:$0xff]
        %v2044 = vld [vmem:[#allocation6 + $0x160] sm:$0xff]
        %v2045 = vld [vmem:[#allocation6 + $0x168] sm:$0xff]
        %v2046 = vld [vmem:[#allocation6 + $0x170] sm:$0xff]
        %v2047 = vld [vmem:[#allocation6 + $0x178] sm:$0xff]
        %v2048 = vld [vmem:[#allocation6 + $0x180] sm:$0xff]
        %v2049 = vld [vmem:[#allocation6 + $0x188] sm:$0xff]
        %v2050 = vld [vmem:[#allocation6 + $0x190] sm:$0xff]
        %v2051 = vld [vmem:[#allocation6 + $0x198] sm:$0xff]
        %v2052 = vld [vmem:[#allocation6 + $0x1a0] sm:$0xff]
        %v2053 = vld [vmem:[#allocation6 + $0x1a8] sm:$0xff]
        %v2054 = vld [vmem:[#allocation6 + $0x1b0] sm:$0xff]
        %v2055 = vld [vmem:[#allocation6 + $0x1b8] sm:$0xff]
        %v2056 = vld [vmem:[#allocation6 + $0x1c0] sm:$0xff]
        %v2057 = vld [vmem:[#allocation6 + $0x1c8] sm:$0xff]
        %v2058 = vld [vmem:[#allocation6 + $0x1d0] sm:$0xff]
        %v2059 = vld [vmem:[#allocation6 + $0x1d8] sm:$0xff]
        %v2060 = vld [vmem:[#allocation6 + $0x1e0] sm:$0xff]
        %v2061 = vld [vmem:[#allocation6 + $0x1e8] sm:$0xff]
        %v2062 = vld [vmem:[#allocation6 + $0x1f0] sm:$0xff]
        %v2063 = vld [vmem:[#allocation6 + $0x1f8] sm:$0xff]
        %v2064 = vld [vmem:[#allocation6 + $0x200] sm:$0xff]
        %v2065 = vld [vmem:[#allocation6 + $0x208] sm:$0xff]
        %v2066 = vld [vmem:[#allocation6 + $0x210] sm:$0xff]
        %v2067 = vld [vmem:[#allocation6 + $0x218] sm:$0xff]
        %v2068 = vld [vmem:[#allocation6 + $0x220] sm:$0xff]
        %v2069 = vld [vmem:[#allocation6 + $0x228] sm:$0xff]
        %v2070 = vld [vmem:[#allocation6 + $0x230] sm:$0xff]
        %v2071 = vld [vmem:[#allocation6 + $0x238] sm:$0xff]
        %vm2072 = vcmask 261120
        %v2074 = vsel %vm2072, %v1978, 0
        %v2077 = vsel %vm2072, %v1981, 0
        %v2080 = vsel %vm2072, %v1984, 0
        %v2083 = vsel %vm2072, %v1987, 0
        %v2086 = vsel %vm2072, %v1990, 0
        %v2089 = vsel %vm2072, %v1993, 0
        %v2092 = vsel %vm2072, %v1996, 0
        %v2095 = vsel %vm2072, %v1999, 0
        %2097 = vmatprep.subr.mxu0 %v2001
        %2098 = vmatpush1.msra.mxu0 %v2000
        %2099 = vmatprep.subr.mxu0 %v2003
        %2100 = vmatpush1.msra.mxu0 %v2002
        %2101 = vmatprep.subr.mxu0 %v2005
        %2102 = vmatpush1.msra.mxu0 %v2004
        %2103 = vmatprep.subr.mxu0 %v2007
        %2104 = vmatpush1.msra.mxu0 %v2006
        %2105 = vmatprep.subr.mxu0 %v2009
        %2106 = vmatpush1.msra.mxu0 %v2008
        %2107 = vmatprep.subr.mxu0 %v2011
        %2108 = vmatpush1.msra.mxu0 %v2010
        %2109 = vmatprep.subr.mxu0 %v2013
        %2110 = vmatpush1.msra.mxu0 %v2012
        %2111 = vmatprep.subr.mxu0 %v2015
        %2112 = vmatpush1.msra.mxu0 %v2014
        %2113 = vmatprep.subr.mxu0 %v2017
        %2114 = vmatpush1.msra.mxu0 %v2016
        %2115 = vmatprep.subr.mxu0 %v2019
        %2116 = vmatpush1.msra.mxu0 %v2018
        %2117 = vmatprep.subr.mxu0 %v2021
        %2118 = vmatpush1.msra.mxu0 %v2020
        %2119 = vmatprep.subr.mxu0 %v2023
        %2120 = vmatpush1.msra.mxu0 %v2022
        %2121 = vmatprep.subr.mxu0 %v2025
        %2122 = vmatpush1.msra.mxu0 %v2024
        %2123 = vmatprep.subr.mxu0 %v2027
        %2124 = vmatpush1.msra.mxu0 %v2026
        %2125 = vmatprep.subr.mxu0 %v2029
        %2126 = vmatpush1.msra.mxu0 %v2028
        %2127 = vmatprep.subr.mxu0 %v2031
        %2128 = vmatpush1.msra.mxu0 %v2030
        %2129 = vmatprep.subr.mxu0 %v2033
        %2130 = vmatpush1.msra.mxu0 %v2032
        %2131 = vmatprep.subr.mxu0 %v2035
        %2132 = vmatpush1.msra.mxu0 %v2034
        %2133 = vmatprep.subr.mxu0 %v2037
        %2134 = vmatpush1.msra.mxu0 %v2036
        %2135 = vmatprep.subr.mxu0 %v2039
        %2136 = vmatpush1.msra.mxu0 %v2038
        %2137 = vmatprep.subr.mxu0 %v2041
        %2138 = vmatpush1.msra.mxu0 %v2040
        %2139 = vmatprep.subr.mxu0 %v2043
        %2140 = vmatpush1.msra.mxu0 %v2042
        %2141 = vmatprep.subr.mxu0 %v2045
        %2142 = vmatpush1.msra.mxu0 %v2044
        %2143 = vmatprep.subr.mxu0 %v2047
        %2144 = vmatpush1.msra.mxu0 %v2046
        %2145 = vmatprep.subr.mxu0 %v2049
        %2146 = vmatpush1.msra.mxu0 %v2048
        %2147 = vmatprep.subr.mxu0 %v2051
        %2148 = vmatpush1.msra.mxu0 %v2050
        %2149 = vmatprep.subr.mxu0 %v2053
        %2150 = vmatpush1.msra.mxu0 %v2052
        %2151 = vmatprep.subr.mxu0 %v2055
        %2152 = vmatpush1.msra.mxu0 %v2054
        %2153 = vmatprep.subr.mxu0 %v2057
        %2154 = vmatpush1.msra.mxu0 %v2056
        %2155 = vmatprep.subr.mxu0 %v2059
        %2156 = vmatpush1.msra.mxu0 %v2058
        %2157 = vmatprep.subr.mxu0 %v2061
        %2158 = vmatpush1.msra.mxu0 %v2060
        %2159 = vmatprep.subr.mxu0 %v2063
        %2160 = vmatpush1.msra.mxu0 %v2062
        %2161 = vmatprep.mubr.f32.mxu0 %v1977
        %2162 = vmatmul.mubr.f32.gmra.mrb[0].mxu0 %v1976
        %v2163 = vpop.f32.mrb[0].mxu0
        %v2164 = vadd.f32 0.0, %v2163
        %v2165 = vpop.f32.mrb[0].mxu0
        %v2166 = vadd.f32 0.0, %v2165
        %2167 = vmatprep.mubr.f32.mxu0 %v1980
        %2168 = vmatmul.mubr.f32.gmra.mrb[0].mxu0 %v1979
        %v2169 = vpop.f32.mrb[0].mxu0
        %v2170 = vadd.f32 0.0, %v2169
        %v2171 = vpop.f32.mrb[0].mxu0
        %v2172 = vadd.f32 0.0, %v2171
        %2173 = vmatprep.mubr.f32.mxu0 %v1983
        %2174 = vmatmul.mubr.f32.gmra.mrb[0].mxu0 %v1982
        %v2175 = vpop.f32.mrb[0].mxu0
        %v2176 = vadd.f32 0.0, %v2175
        %v2177 = vpop.f32.mrb[0].mxu0
        %v2178 = vadd.f32 0.0, %v2177
        %2179 = vmatprep.mubr.f32.mxu0 %v1986
        %2180 = vmatmul.mubr.f32.gmra.mrb[0].mxu0 %v1985
        %v2181 = vpop.f32.mrb[0].mxu0
        %v2182 = vadd.f32 0.0, %v2181
        %v2183 = vpop.f32.mrb[0].mxu0
        %v2184 = vadd.f32 0.0, %v2183
        %2185 = vmatprep.mubr.f32.mxu0 %v1989
        %2186 = vmatmul.mubr.f32.gmra.mrb[0].mxu0 %v1988
        %v2187 = vpop.f32.mrb[0].mxu0
        %v2188 = vadd.f32 0.0, %v2187
        %v2189 = vpop.f32.mrb[0].mxu0
        %v2190 = vadd.f32 0.0, %v2189
        %2191 = vmatprep.mubr.f32.mxu0 %v1992
        %2192 = vmatmul.mubr.f32.gmra.mrb[0].mxu0 %v1991
        %v2193 = vpop.f32.mrb[0].mxu0
        %v2194 = vadd.f32 0.0, %v2193
        %v2195 = vpop.f32.mrb[0].mxu0
        %v2196 = vadd.f32 0.0, %v2195
        %2197 = vmatprep.mubr.f32.mxu0 %v1995
        %2198 = vmatmul.mubr.f32.gmra.mrb[0].mxu0 %v1994
        %v2199 = vpop.f32.mrb[0].mxu0
        %v2200 = vadd.f32 0.0, %v2199
        %v2201 = vpop.f32.mrb[0].mxu0
        %v2202 = vadd.f32 0.0, %v2201
        %2203 = vmatprep.mubr.f32.mxu0 %v1998
        %2204 = vmatmul.mubr.f32.gmra.mrb[0].mxu0 %v1997
        %v2205 = vpop.f32.mrb[0].mxu0
        %v2206 = vadd.f32 0.0, %v2205
        %v2207 = vpop.f32.mrb[0].mxu0
        %v2208 = vadd.f32 0.0, %v2207
        %2209 = vdwg.mxu0
        %2210 = vmatprep.subr.mxu0 %v2065
        %2211 = vmatpush1.msra.mxu0 %v2064
        %2212 = vmatprep.subr.mxu0 %v2067
        %2213 = vmatpush1.msra.mxu0 %v2066
        %2214 = vmatprep.subr.mxu0 %v2069
        %2215 = vmatpush1.msra.mxu0 %v2068
        %2216 = vmatprep.subr.mxu0 %v2071
        %2217 = vmatpush1.msra.mxu0 %v2070
        %2218 = vmatprep.subr.mxu0 0.0
        %2219 = vmatpush1.msra.mxu0 0.0
        %2220 = vmatprep.subr.mxu0 0.0
        %2221 = vmatpush1.msra.mxu0 0.0
        %2222 = vmatprep.subr.mxu0 0.0
        %2223 = vmatpush1.msra.mxu0 0.0
        %2224 = vmatprep.subr.mxu0 0.0
        %2225 = vmatpush1.msra.mxu0 0.0
        %2226 = vmatprep.subr.mxu0 0.0
        %2227 = vmatpush1.msra.mxu0 0.0
        %2228 = vmatprep.subr.mxu0 0.0
        %2229 = vmatpush1.msra.mxu0 0.0
        %2230 = vmatprep.subr.mxu0 0.0
        %2231 = vmatpush1.msra.mxu0 0.0
        %2232 = vmatprep.subr.mxu0 0.0
        %2233 = vmatpush1.msra.mxu0 0.0
        %2234 = vmatprep.subr.mxu0 0.0
        %2235 = vmatpush1.msra.mxu0 0.0
        %2236 = vmatprep.subr.mxu0 0.0
        %2237 = vmatpush1.msra.mxu0 0.0
        %2238 = vmatprep.subr.mxu0 0.0
        %2239 = vmatpush1.msra.mxu0 0.0
        %2240 = vmatprep.subr.mxu0 0.0
        %2241 = vmatpush1.msra.mxu0 0.0
        %2242 = vmatprep.subr.mxu0 0.0
        %2243 = vmatpush1.msra.mxu0 0.0
        %2244 = vmatprep.subr.mxu0 0.0
        %2245 = vmatpush1.msra.mxu0 0.0
        %2246 = vmatprep.subr.mxu0 0.0
        %2247 = vmatpush1.msra.mxu0 0.0
        %2248 = vmatprep.subr.mxu0 0.0
        %2249 = vmatpush1.msra.mxu0 0.0
        %2250 = vmatprep.subr.mxu0 0.0
        %2251 = vmatpush1.msra.mxu0 0.0
        %2252 = vmatprep.subr.mxu0 0.0
        %2253 = vmatpush1.msra.mxu0 0.0
        %2254 = vmatprep.subr.mxu0 0.0
        %2255 = vmatpush1.msra.mxu0 0.0
        %2256 = vmatprep.subr.mxu0 0.0
        %2257 = vmatpush1.msra.mxu0 0.0
        %2258 = vmatprep.subr.mxu0 0.0
        %2259 = vmatpush1.msra.mxu0 0.0
        %2260 = vmatprep.subr.mxu0 0.0
        %2261 = vmatpush1.msra.mxu0 0.0
        %2262 = vmatprep.subr.mxu0 0.0
        %2263 = vmatpush1.msra.mxu0 0.0
        %2264 = vmatprep.subr.mxu0 0.0
        %2265 = vmatpush1.msra.mxu0 0.0
        %2266 = vmatprep.subr.mxu0 0.0
        %2267 = vmatpush1.msra.mxu0 0.0
        %2268 = vmatprep.subr.mxu0 0.0
        %2269 = vmatpush1.msra.mxu0 0.0
        %2270 = vmatprep.subr.mxu0 0.0
        %2271 = vmatpush1.msra.mxu0 0.0
        %2272 = vmatprep.subr.mxu0 0.0
        %2273 = vmatpush1.msra.mxu0 0.0
        %2274 = vmatprep.mubr.f32.mxu0 0.0
        %2275 = vmatmul.mubr.f32.gmra.mrb[0].mxu0 %v2074
        %v2276 = vpop.f32.mrb[0].mxu0
        %v2277 = vadd.f32 %v2164, %v2276
        %v2278 = vpop.f32.mrb[0].mxu0
        %v2279 = vadd.f32 %v2166, %v2278
        %2280 = vmatprep.mubr.f32.mxu0 0.0
        %2281 = vmatmul.mubr.f32.gmra.mrb[0].mxu0 %v2077
        %v2282 = vpop.f32.mrb[0].mxu0
        %v2283 = vadd.f32 %v2170, %v2282
        %v2284 = vpop.f32.mrb[0].mxu0
        %v2285 = vadd.f32 %v2172, %v2284
        %2286 = vmatprep.mubr.f32.mxu0 0.0
        %2287 = vmatmul.mubr.f32.gmra.mrb[0].mxu0 %v2080
        %v2288 = vpop.f32.mrb[0].mxu0
        %v2289 = vadd.f32 %v2176, %v2288
        %v2290 = vpop.f32.mrb[0].mxu0
        %v2291 = vadd.f32 %v2178, %v2290
        %2292 = vmatprep.mubr.f32.mxu0 0.0
        %2293 = vmatmul.mubr.f32.gmra.mrb[0].mxu0 %v2083
        %v2294 = vpop.f32.mrb[0].mxu0
        %v2295 = vadd.f32 %v2182, %v2294
        %v2296 = vpop.f32.mrb[0].mxu0
        %v2297 = vadd.f32 %v2184, %v2296
        %2298 = vmatprep.mubr.f32.mxu0 0.0
        %2299 = vmatmul.mubr.f32.gmra.mrb[0].mxu0 %v2086
        %v2300 = vpop.f32.mrb[0].mxu0
        %v2301 = vadd.f32 %v2188, %v2300
        %v2302 = vpop.f32.mrb[0].mxu0
        %v2303 = vadd.f32 %v2190, %v2302
        %2304 = vmatprep.mubr.f32.mxu0 0.0
        %2305 = vmatmul.mubr.f32.gmra.mrb[0].mxu0 %v2089
        %v2306 = vpop.f32.mrb[0].mxu0
        %v2307 = vadd.f32 %v2194, %v2306
        %v2308 = vpop.f32.mrb[0].mxu0
        %v2309 = vadd.f32 %v2196, %v2308
        %2310 = vmatprep.mubr.f32.mxu0 0.0
        %2311 = vmatmul.mubr.f32.gmra.mrb[0].mxu0 %v2092
        %v2312 = vpop.f32.mrb[0].mxu0
        %v2313 = vadd.f32 %v2200, %v2312
        %v2314 = vpop.f32.mrb[0].mxu0
        %v2315 = vadd.f32 %v2202, %v2314
        %2316 = vmatprep.mubr.f32.mxu0 0.0
        %2317 = vmatmul.mubr.f32.gmra.mrb[0].mxu0 %v2095
        %v2318 = vpop.f32.mrb[0].mxu0
        %v2319 = vadd.f32 %v2206, %v2318
        %v2320 = vpop.f32.mrb[0].mxu0
        %v2321 = vadd.f32 %v2208, %v2320
        %2322 = vdwg.mxu0
        %vm2323 = vcmp.ge.f32.partialorder %v2277, 0.0
        %vm2324 = vcmp.ge.f32.partialorder %v2279, 0.0
        %vm2325 = vcmp.ge.f32.partialorder %v2283, 0.0
        %vm2326 = vcmp.ge.f32.partialorder %v2285, 0.0
        %vm2327 = vcmp.ge.f32.partialorder %v2289, 0.0
        %vm2328 = vcmp.ge.f32.partialorder %v2291, 0.0
        %vm2329 = vcmp.ge.f32.partialorder %v2295, 0.0
        %vm2330 = vcmp.ge.f32.partialorder %v2297, 0.0
        %vm2331 = vcmp.ge.f32.partialorder %v2301, 0.0
        %vm2332 = vcmp.ge.f32.partialorder %v2303, 0.0
        %vm2333 = vcmp.ge.f32.partialorder %v2307, 0.0
        %vm2334 = vcmp.ge.f32.partialorder %v2309, 0.0
        %vm2335 = vcmp.ge.f32.partialorder %v2313, 0.0
        %vm2336 = vcmp.ge.f32.partialorder %v2315, 0.0
        %vm2337 = vcmp.ge.f32.partialorder %v2319, 0.0
        %vm2338 = vcmp.ge.f32.partialorder %v2321, 0.0
        %v2339 = vmul.f32 %v2277, 0.2
        %v2340 = vmul.f32 %v2279, 0.2
        %v2341 = vmul.f32 %v2283, 0.2
        %v2342 = vmul.f32 %v2285, 0.2
        %v2343 = vmul.f32 %v2289, 0.2
        %v2344 = vmul.f32 %v2291, 0.2
        %v2345 = vmul.f32 %v2295, 0.2
        %v2346 = vmul.f32 %v2297, 0.2
        %v2347 = vmul.f32 %v2301, 0.2
        %v2348 = vmul.f32 %v2303, 0.2
        %v2349 = vmul.f32 %v2307, 0.2
        %v2350 = vmul.f32 %v2309, 0.2
        %v2351 = vmul.f32 %v2313, 0.2
        %v2352 = vmul.f32 %v2315, 0.2
        %v2353 = vmul.f32 %v2319, 0.2
        %v2354 = vmul.f32 %v2321, 0.2
        %v2355 = vsel %vm2323, %v2277, %v2339
        %v2356 = vsel %vm2324, %v2279, %v2340
        %v2357 = vsel %vm2325, %v2283, %v2341
        %v2358 = vsel %vm2326, %v2285, %v2342
        %v2359 = vsel %vm2327, %v2289, %v2343
        %v2360 = vsel %vm2328, %v2291, %v2344
        %v2361 = vsel %vm2329, %v2295, %v2345
        %v2362 = vsel %vm2330, %v2297, %v2346
        %v2363 = vsel %vm2331, %v2301, %v2347
        %v2364 = vsel %vm2332, %v2303, %v2348
        %v2365 = vsel %vm2333, %v2307, %v2349
        %v2366 = vsel %vm2334, %v2309, %v2350
        %v2367 = vsel %vm2335, %v2313, %v2351
        %v2368 = vsel %vm2336, %v2315, %v2352
        %v2369 = vsel %vm2337, %v2319, %v2353
        %v2370 = vsel %vm2338, %v2321, %v2354
        %2371 = vst [vmem:[%s318] sm:$0xff] %v2355
        %2372 = vst [vmem:[%s318 + $0x8] sm:$0xff] %v2356
        %2373 = vst [vmem:[%s318 + $0x10] sm:$0xff] %v2357
        %2374 = vst [vmem:[%s318 + $0x18] sm:$0xff] %v2358
        %2375 = vst [vmem:[%s318 + $0x20] sm:$0xff] %v2359
        %2376 = vst [vmem:[%s318 + $0x28] sm:$0xff] %v2360
        %2377 = vst [vmem:[%s318 + $0x30] sm:$0xff] %v2361
        %2378 = vst [vmem:[%s318 + $0x38] sm:$0xff] %v2362
        %2379 = vst [vmem:[%s318 + $0x40] sm:$0xff] %v2363
        %2380 = vst [vmem:[%s318 + $0x48] sm:$0xff] %v2364
        %2381 = vst [vmem:[%s318 + $0x50] sm:$0xff] %v2365
        %2382 = vst [vmem:[%s318 + $0x58] sm:$0xff] %v2366
        %2383 = vst [vmem:[%s318 + $0x60] sm:$0xff] %v2367
        %2384 = vst [vmem:[%s318 + $0x68] sm:$0xff] %v2368
        %2385 = vst [vmem:[%s318 + $0x70] sm:$0xff] %v2369
        %2386 = vst [vmem:[%s318 + $0x78] sm:$0xff] %v2370
        %p2387 = scmp.lt.s32.totalorder %s20, 1
        %s2388 = scalar_select %p2387, %s20, 1
        %s2389 = smul.addr %s2388, 16
        %s2390 = smul.addr %s2389, 8
        %s2391 = scalar_lea.vmem %s8, %s2390
        // Predicated region
        $region57: #{latent4lsnd_forward.1} parent=51 // pred_check
          %p2392 = pneg %p211
        $region58: #{latent4lsnd_forward.1} parent=51 // pred_check_branch
          %2394 = sbr.rel (%p2392) target = $region60
        $region59: #{latent4lsnd_forward.1} parent=51 // pred_region
          _
        $region60: #{latent4lsnd_forward.1} parent=51 // pred_fallthru
          _
      $region52: #{latent4lsnd_forward.1} parent=5 // pred_fallthru
        _
      %p2395 = scmp.le.s32.totalorder 2, %s15
      // Predicated region
      $region61: #{latent4lsnd_forward.1} parent=5 // pred_check
        %p2396 = pneg %p2395
      $region62: #{latent4lsnd_forward.1} parent=5 // pred_check_branch
        %2398 = sbr.rel (%p2396) target = $region64
      $region63: #{latent4lsnd_forward.1} parent=5 // pred_region
        %s2399 = ssub.s32 %s15, 2
        // Predicated region
        $region65: #{latent4lsnd_forward.1} parent=63 // pred_check
          %p2400 = pneg %p217
        $region66: #{latent4lsnd_forward.1} parent=63 // pred_check_branch
          %2402 = sbr.rel (%p2400) target = $region68
        $region67: #{latent4lsnd_forward.1} parent=63 // pred_region
          %p2403 = scmp.lt.s32.totalorder %s21, 1
          %s2404 = scalar_select %p2403, %s21, 1
          %s2405 = smul.addr %s2404, 16
          %s2406 = smul.addr %s2405, 8
          %s2407 = scalar_lea.vmem %s8, %s2406
        $region68: #{latent4lsnd_forward.1} parent=63 // pred_fallthru
          _
      $region64: #{latent4lsnd_forward.1} parent=5 // pred_fallthru
        _
    $region6: #{latent4lsnd_forward.1} parent=1 // loop_footer
      %s19 = sadd.s32 1, %s15
    $region7: #{latent4lsnd_forward.1} parent=1 // loop_footer_branch
      %14 = sbr.rel target = $region3
    $region8: #{latent4lsnd_forward.1} parent=1 // loop_exit
      _
    %2408 = vsyncpa [#allocation8], 1
    %s2409 = scalar_lea.sflag [#allocation8], 1
    %2410 = vsyncpa %s2409, 1

</llo_original>
